<compile_context>
chip_gen: v7x
topology: tpu7x:2x2x1
jax: 0.10.0
libtpu: 0.0.40
codegen_flags: <defaults>
</compile_context>

<pallas_src>
import functools

import jax
import jax.numpy as jnp
from jax import lax
from jax.experimental import pallas as pl
from jax.experimental.pallas import tpu as pltpu

_LN_EPS = 1e-5                     # nn.LayerNorm default eps


# --------------------------------------------------------------------------- #
# Small helpers
# --------------------------------------------------------------------------- #
def _gelu_tanh(x):
    # TODO(synk): PyTorch nn.GELU defaults to the exact erf form; the tanh
    # approximation is used here (and in the reference) for Mosaic-safe lowering.
    c = 0.7978845608028654  # sqrt(2/pi)
    return 0.5 * x * (1.0 + jnp.tanh(c * (x + 0.044715 * x * x * x)))


def _layernorm(x, g, b):
    mu = jnp.mean(x, axis=-1, keepdims=True)
    xc = x - mu
    var = jnp.mean(xc * xc, axis=-1, keepdims=True)
    return xc * lax.rsqrt(var + _LN_EPS) * g + b


def _round_up(x, m):
    return (x + m - 1) // m * m


def _col_tile(total, want=512):
    """Largest multiple of 128 <= `want` that divides `total`, else the full dim."""
    t = min(want, total)
    t -= t % 128
    while t >= 128 and total % t:
        t -= 128
    return t if t >= 128 else total


_VMEM_LIMIT = None


def _vmem_limit():
    """~75% of physical VMEM (v7x: 48 MiB, v5e/v6e: 96 MiB), capped at 100 MiB."""
    global _VMEM_LIMIT
    if _VMEM_LIMIT is None:
        limit = 48 * 1024 * 1024
        try:
            cap = getattr(pltpu.get_tpu_info(), "vmem_capacity_bytes", None)
            if cap:
                limit = int(min(cap * 3 // 4, 100 * 1024 * 1024))
        except Exception:
            pass
        _VMEM_LIMIT = limit
    return _VMEM_LIMIT


_BUFFERED_ONE = None


def _single_buffer_mode():
    """pl.Buffered(1) for constant-index (LN-param / bias) specs: resident operands
    do not need Pallas' default double buffer. Probed once via an AOT compile so we
    fall back cleanly if BlockSpec.pipeline_mode is unsupported on this JAX build."""
    global _BUFFERED_ONE
    if _BUFFERED_ONE is None:
        try:
            mode = pl.Buffered(1)

            def _probe_kernel(w_ref, o_ref):
                o_ref[...] = w_ref[...] + 1.0

            probe = pl.pallas_call(
                _probe_kernel,
                out_shape=jax.ShapeDtypeStruct((16, 128), jnp.float32),
                grid=(2,),
                in_specs=[pl.BlockSpec((8, 128), lambda i: (0, 0),
                                       pipeline_mode=mode)],
                out_specs=pl.BlockSpec((8, 128), lambda i: (i, 0)),
            )
            jax.jit(probe).lower(
                jax.ShapeDtypeStruct((8, 128), jnp.float32)).compile()
            _BUFFERED_ONE = mode
        except Exception:
            _BUFFERED_ONE = False
    return _BUFFERED_ONE or None


def _const_spec(shape):
    """BlockSpec for an operand that is identical for every grid step."""
    index_map = lambda *_: (0,) * len(shape)
    mode = _single_buffer_mode()
    if mode is not None:
        return pl.BlockSpec(shape, index_map, pipeline_mode=mode)
    return pl.BlockSpec(shape, index_map)


def _compiler_params(semantics):
    return pltpu.CompilerParams(dimension_semantics=semantics,
                                vmem_limit_bytes=_vmem_limit())


# --------------------------------------------------------------------------- #
# Kernels
# --------------------------------------------------------------------------- #
def _ln_matmul_kernel(x_ref, g_ref, b_ref, w_ref, wb_ref, o_ref):
    """o[i, j] = LayerNorm(x[i]) @ W[:, j] + b[j] for one (TM, TN) output tile."""
    x = x_ref[...].astype(jnp.float32)
    y = _layernorm(x, g_ref[...].astype(jnp.float32), b_ref[...].astype(jnp.float32))
    acc = jnp.dot(y.astype(w_ref.dtype), w_ref[...],
                  preferred_element_type=jnp.float32)
    o_ref[...] = (acc + wb_ref[...].astype(jnp.float32)).astype(o_ref.dtype)


def _attention_kernel(qkv_ref, o_ref, *, heads, dim, scale):
    """Multi-head softmax attention for one batch row.

    Reads Q/K/V directly from the fused (N, 3*dim) QKV slab (q | k | v column
    layout of nn.Linear(dim, 3*dim) + chunk) and writes the head-concatenated
    (N, dim) output in a single lane-dense store.
    """
    # TODO(synk): flash-style KV-tiled online softmax before scaling the sequence
    # length, and head-group column blocks once (group*head_dim) % 128 == 0.
    dh = dim // heads
    outs = []
    for h in range(heads):
        q = qkv_ref[:, h * dh:(h + 1) * dh].astype(jnp.float32) * scale
        k = qkv_ref[:, dim + h * dh:dim + (h + 1) * dh].astype(jnp.float32)
        v = qkv_ref[:, 2 * dim + h * dh:2 * dim + (h + 1) * dh]
        s = lax.dot_general(q, k, (((1,), (1,)), ((), ())),     # q @ k^T
                            preferred_element_type=jnp.float32)
        s = s - jnp.max(s, axis=-1, keepdims=True)
        p = jnp.exp(s)
        p = p * pl.reciprocal(jnp.sum(p, axis=-1, keepdims=True), approx=True)
        outs.append(jnp.dot(p.astype(v.dtype), v,
                            preferred_element_type=jnp.float32))
    o_ref[...] = jnp.concatenate(outs, axis=-1).astype(o_ref.dtype)


def _attn_out_residual_kernel(a_ref, x_ref, w_ref, b_ref, o_ref):
    """o[i, j] = a[i] @ Wo[:, j] + bo[j] + x[i, j]  (out-projection + residual)."""
    acc = jnp.dot(a_ref[...].astype(w_ref.dtype), w_ref[...],
                  preferred_element_type=jnp.float32)
    acc = acc + b_ref[...].astype(jnp.float32) + x_ref[...].astype(jnp.float32)
    o_ref[...] = acc.astype(o_ref.dtype)


def _ln_mlp_residual_kernel(x_ref, g_ref, b_ref, w1_ref, b1_ref, w2_ref, b2_ref,
                            o_ref, y_ref, acc_ref):
    """o[i] = GELU(LayerNorm(x[i]) @ W1 + b1) @ W2 + b2 + x[i].

    K-tiled over the MLP hidden dim (grid axis 1, "arbitrary"): each step
    consumes a (D, TK) slab of W1 and a (TK, D) slab of W2 and accumulates into
    a VMEM f32 scratch; bias + residual are applied at the last K step.
    """
    k = pl.program_id(1)

    @pl.when(k == 0)
    def _init():
        x = x_ref[...].astype(jnp.float32)
        y_ref[...] = _layernorm(x, g_ref[...].astype(jnp.float32),
                                b_ref[...].astype(jnp.float32))
        acc_ref[...] = jnp.zeros_like(acc_ref)

    h = jnp.dot(y_ref[...].astype(w1_ref.dtype), w1_ref[...],
                preferred_element_type=jnp.float32)
    h = _gelu_tanh(h + b1_ref[...].astype(jnp.float32))
    acc_ref[...] += jnp.dot(h.astype(w2_ref.dtype), w2_ref[...],
                            preferred_element_type=jnp.float32)

    @pl.when(k == pl.num_programs(1) - 1)
    def _finalize():
        out = (acc_ref[...] + b2_ref[...].astype(jnp.float32)
               + x_ref[...].astype(jnp.float32))
        o_ref[...] = out.astype(o_ref.dtype)


# --------------------------------------------------------------------------- #
# pallas_call wrappers
# --------------------------------------------------------------------------- #
def _ln_matmul(x2d, gamma, beta, w, wb, *, tm, col_block=512):
    R, D = x2d.shape
    Do = w.shape[1]
    tn = _col_tile(Do, col_block)
    cost = pl.CostEstimate(
        flops=int(2 * R * D * Do + 10 * R * D),
        transcendentals=int(R),
        bytes_accessed=int(R * D * x2d.dtype.itemsize
                           + w.size * w.dtype.itemsize
                           + R * Do * x2d.dtype.itemsize))
    return pl.pallas_call(
        _ln_matmul_kernel,
        out_shape=jax.ShapeDtypeStruct((R, Do), x2d.dtype),
        grid=(R // tm, Do // tn),
        in_specs=[
            pl.BlockSpec((tm, D), lambda i, j: (i, 0)),   # x row tile (resident over j)
            _const_spec((1, D)),                          # LN gamma
            _const_spec((1, D)),                          # LN beta
            pl.BlockSpec((D, tn), lambda i, j: (0, j)),   # W column slab
            pl.BlockSpec((1, tn), lambda i, j: (0, j)),   # bias slab
        ],
        out_specs=pl.BlockSpec((tm, tn), lambda i, j: (i, j)),
        compiler_params=_compiler_params(("parallel", "parallel")),
        cost_estimate=cost,
    )(x2d, gamma.reshape(1, D), beta.reshape(1, D), w, wb.reshape(1, Do))


def _attention(qkv, *, batch, seq, dim, heads, scale, out_dtype):
    R = qkv.shape[0]
    kernel = functools.partial(_attention_kernel, heads=heads, dim=dim, scale=scale)
    cost = pl.CostEstimate(
        flops=int(4 * batch * heads * seq * seq * (dim // heads)),
        transcendentals=int(batch * heads * seq * seq),
        bytes_accessed=int(batch * seq * 4 * dim * qkv.dtype.itemsize))
    return pl.pallas_call(
        kernel,
        out_shape=jax.ShapeDtypeStruct((R, dim), out_dtype),
        grid=(batch,),
        in_specs=[pl.BlockSpec((seq, 3 * dim), lambda b: (b, 0))],
        out_specs=pl.BlockSpec((seq, dim), lambda b: (b, 0)),
        compiler_params=_compiler_params(("parallel",)),
        cost_estimate=cost,
    )(qkv)


def _attn_out_residual(a2d, x2d, w, b, *, tm, col_block=512):
    R, D = a2d.shape
    Do = w.shape[1]
    tn = _col_tile(Do, col_block)
    cost = pl.CostEstimate(
        flops=int(2 * R * D * Do),
        transcendentals=0,
        bytes_accessed=int(R * (D + 2 * Do) * x2d.dtype.itemsize
                           + w.size * w.dtype.itemsize))
    return pl.pallas_call(
        _attn_out_residual_kernel,
        out_shape=jax.ShapeDtypeStruct((R, Do), x2d.dtype),
        grid=(R // tm, Do // tn),
        in_specs=[
            pl.BlockSpec((tm, D), lambda i, j: (i, 0)),    # attn out (resident over j)
            pl.BlockSpec((tm, tn), lambda i, j: (i, j)),   # residual slice
            pl.BlockSpec((D, tn), lambda i, j: (0, j)),    # W_o column slab
            pl.BlockSpec((1, tn), lambda i, j: (0, j)),    # b_o slab
        ],
        out_specs=pl.BlockSpec((tm, tn), lambda i, j: (i, j)),
        compiler_params=_compiler_params(("parallel", "parallel")),
        cost_estimate=cost,
        input_output_aliases={1: 0},   # output reuses x's HBM buffer
    )(a2d, x2d, w, b.reshape(1, Do))


def _ln_mlp_residual(x2d, gamma, beta, w1, b1, w2, b2, *, tm, k_block=512):
    R, D = x2d.shape
    Dh = w1.shape[1]
    tk = _col_tile(Dh, k_block)
    cost = pl.CostEstimate(
        flops=int(4 * R * D * Dh + 10 * R * (D + Dh)),
        transcendentals=int(R * Dh + R),
        bytes_accessed=int(2 * R * D * x2d.dtype.itemsize
                           + (w1.size + w2.size) * w1.dtype.itemsize))
    return pl.pallas_call(
        _ln_mlp_residual_kernel,
        out_shape=jax.ShapeDtypeStruct((R, D), x2d.dtype),
        grid=(R // tm, Dh // tk),
        in_specs=[
            pl.BlockSpec((tm, D), lambda i, k: (i, 0)),   # x row tile (resident over k)
            _const_spec((1, D)),                          # LN gamma
            _const_spec((1, D)),                          # LN beta
            pl.BlockSpec((D, tk), lambda i, k: (0, k)),   # W1 column slab
            pl.BlockSpec((1, tk), lambda i, k: (0, k)),   # b1 slab
            pl.BlockSpec((tk, D), lambda i, k: (k, 0)),   # W2 row slab
            _const_spec((1, D)),                          # b2
        ],
        out_specs=pl.BlockSpec((tm, D), lambda i, k: (i, 0)),
        scratch_shapes=[pltpu.VMEM((tm, D), jnp.float32),    # LayerNorm(x) cache
                        pltpu.VMEM((tm, D), jnp.float32)],   # f32 accumulator
        compiler_params=_compiler_params(("parallel", "arbitrary")),
        cost_estimate=cost,
        input_output_aliases={0: 0},   # output reuses x's HBM buffer
    )(x2d, gamma.reshape(1, D), beta.reshape(1, D),
      w1, b1.reshape(1, Dh), w2, b2.reshape(1, D))


# --------------------------------------------------------------------------- #
# Transformer forward (Pallas) and pure-JAX reference
# --------------------------------------------------------------------------- #
def transformer_forward(x, params, *, heads, block_rows=256):
    """Pallas forward of Transformer(dim, depth, heads, mlp_dim, dropout).

    x: (B, N, D). Eval mode (dropout = identity), mask=None path.
    block_rows: row-tile size; 256 is a safe default on v7x (64 MiB VMEM),
    512 also works on v5e/v6e (128 MiB VMEM).
    """
    B, N, D = x.shape
    assert D % heads == 0
    # TODO(synk): pad + mask the sequence axis when N is not a multiple of 8.
    assert N % 8 == 0, "fused attention path needs seq len to be a multiple of 8"
    scale = float(D) ** -0.5          # module uses dim ** -0.5, not head_dim ** -0.5

    block_rows = max(8, block_rows - block_rows % 8)
    R = B * N
    if R <= block_rows:
        R_pad = tm = _round_up(R, 8)
    else:
        R_pad, tm = _round_up(R, block_rows), block_rows

    x2d = x.reshape(R, D)
    if R_pad != R:
        # Padded rows never mix with real rows (every op is row-local over the
        # flattened batch*seq axis); they are sliced off at the end.
        x2d = jnp.pad(x2d, ((0, R_pad - R), (0, 0)))

    for p in params:
        # --- Residual(LayerNormalize(Attention)) ---
        qkv = _ln_matmul(x2d, p["ln1_g"], p["ln1_b"], p["w_qkv"], p["b_qkv"],
                         tm=tm)                                   # (R_pad, 3D)
        attn = _attention(qkv, batch=B, seq=N, dim=D, heads=heads, scale=scale,
                          out_dtype=x2d.dtype)                    # (R_pad, D)
        # TODO(synk): attention mask and nn.Dropout omitted (mask=None, eval mode).
        x2d = _attn_out_residual(attn, x2d, p["w_o"], p["b_o"], tm=tm)
        # --- Residual(LayerNormalize(MLP_Block)) ---
        x2d = _ln_mlp_residual(x2d, p["ln2_g"], p["ln2_b"],
                               p["w1"], p["b1"], p["w2"], p["b2"], tm=tm)

    if R_pad != R:
        x2d = x2d[:R]
    return x2d.reshape(B, N, D)


def transformer_reference(x, params, *, heads):
    """Pure-JAX reference (HIGHEST matmul precision)."""
    B, N, D = x.shape
    dh = D // heads
    scale = float(D) ** -0.5
    prec = lax.Precision.HIGHEST
    for p in params:
        y = _layernorm(x, p["ln1_g"], p["ln1_b"])
        qkv = jnp.dot(y, p["w_qkv"], precision=prec) + p["b_qkv"]
        qkv = qkv.reshape(B, N, 3, heads, dh)
        q = qkv[:, :, 0].transpose(0, 2, 1, 3)
        k = qkv[:, :, 1].transpose(0, 2, 1, 3)
        v = qkv[:, :, 2].transpose(0, 2, 1, 3)
        s = jnp.einsum("bhid,bhjd->bhij", q, k, precision=prec) * scale
        a = jax.nn.softmax(s, axis=-1)
        o = jnp.einsum("bhij,bhjd->bhid", a, v, precision=prec)
        o = o.transpose(0, 2, 1, 3).reshape(B, N, D)
        x = jnp.dot(o, p["w_o"], precision=prec) + p["b_o"] + x
        y = _layernorm(x, p["ln2_g"], p["ln2_b"])
        h = _gelu_tanh(jnp.dot(y, p["w1"], precision=prec) + p["b1"])
        x = jnp.dot(h, p["w2"], precision=prec) + p["b2"] + x
    return x


def init_params(key, dim, depth, heads, mlp_dim, param_dtype=jnp.bfloat16):
    """Deterministic synthetic weights with PyTorch-like init scales.

    param_dtype=bfloat16 (default) halves weight DMA/VMEM and feeds bf16 MXU
    operands on v5e/v6e/v7x; biases and LayerNorm params stay f32.
    """
    def linear(k, fan_in, fan_out):
        kw, kb = jax.random.split(k)
        bound = float(fan_in) ** -0.5
        w = jax.random.uniform(kw, (fan_in, fan_out), jnp.float32, -bound, bound)
        b = jax.random.uniform(kb, (fan_out,), jnp.float32, -bound, bound)
        return w.astype(param_dtype), b

    params = []
    for _ in range(depth):
        key, kqkv, ko, k1, k2, kln1, kln2 = jax.random.split(key, 7)
        w_qkv, b_qkv = linear(kqkv, dim, 3 * dim)
        w_o, b_o = linear(ko, dim, dim)
        w1, b1 = linear(k1, dim, mlp_dim)
        w2, b2 = linear(k2, mlp_dim, dim)
        g1k, b1k = jax.random.split(kln1)
        g2k, b2k = jax.random.split(kln2)
        params.append(dict(
            ln1_g=1.0 + 0.02 * jax.random.normal(g1k, (dim,), jnp.float32),
            ln1_b=0.02 * jax.random.normal(b1k, (dim,), jnp.float32),
            w_qkv=w_qkv, b_qkv=b_qkv, w_o=w_o, b_o=b_o,
            ln2_g=1.0 + 0.02 * jax.random.normal(g2k, (dim,), jnp.float32),
            ln2_b=0.02 * jax.random.normal(b2k, (dim,), jnp.float32),
            w1=w1, b1=b1, w2=w2, b2=b2,
        ))
    return params


def _params_to_f32(params):
    return [{k: v.astype(jnp.float32) for k, v in p.items()} for p in params]


if __name__ == "__main__":
    key = jax.random.PRNGKey(0)
    kx, kx2, kp = jax.random.split(key, 3)

    # Small shapes consistent with Transformer(dim, depth, heads, mlp_dim, dropout)
    D, heads, mlp_dim, depth = 32, 4, 64, 2

    # --- f32 weights/activations: tight check against the pure-JAX reference.
    # block_rows=8 forces a multi-step, pipelined row grid at this tiny shape
    # (production default is 256).
    B, N = 2, 8
    x = jax.random.normal(kx, (B, N, D), dtype=jnp.float32)
    params_f32 = init_params(kp, D, depth, heads, mlp_dim, param_dtype=jnp.float32)
    fwd_f32 = jax.jit(functools.partial(transformer_forward, heads=heads,
                                        block_rows=8))
    out = jax.block_until_ready(fwd_f32(x, params_f32))
    ref = transformer_reference(x, params_f32, heads=heads)
    assert out.shape == (B, N, D)
    max_diff = float(jnp.max(jnp.abs(out - ref)))
    assert jnp.allclose(out, ref, atol=2e-2, rtol=2e-2), f"f32 mismatch: {max_diff}"

    # --- bf16 weights + bf16 activations (production default): looser check that
    # validates the low-precision path end to end (seq=16 keeps bf16 blocks
    # 16-row aligned).
    B2, N2 = 2, 16
    x2 = jax.random.normal(kx2, (B2, N2, D), dtype=jnp.float32)
    params_bf16 = init_params(kp, D, depth, heads, mlp_dim)      # bf16 default
    fwd_bf16 = jax.jit(functools.partial(transformer_forward, heads=heads))
    out_bf16 = jax.block_until_ready(fwd_bf16(x2.astype(jnp.bfloat16), params_bf16))
    ref_bf16 = transformer_reference(x2.astype(jnp.bfloat16).astype(jnp.float32),
                                     _params_to_f32(params_bf16), heads=heads)
    assert out_bf16.shape == (B2, N2, D)
    max_diff_bf16 = float(jnp.max(jnp.abs(out_bf16.astype(jnp.float32) - ref_bf16)))
    assert jnp.allclose(out_bf16.astype(jnp.float32), ref_bf16,
                        atol=1e-1, rtol=5e-2), f"bf16 mismatch: {max_diff_bf16}"

    print("KERNEL_OK")
</pallas_src>

<mosaic_0001>
module attributes {stable_mosaic.version = 11 : i64} {
  func.func @_attn_out_residual_kernel(%arg0: i32, %arg1: i32, %arg2: memref<8x32xf32, #tpu.memory_space<vmem>>, %arg3: memref<8x32xf32, #tpu.memory_space<vmem>>, %arg4: memref<32x32xf32, #tpu.memory_space<vmem>>, %arg5: memref<1x32xf32, #tpu.memory_space<vmem>>, %arg6: memref<8x32xf32, #tpu.memory_space<vmem>>) attributes {dimension_semantics = [#tpu.dimension_semantics<parallel>, #tpu.dimension_semantics<parallel>], iteration_bounds = array<i64: 2, 1>, scalar_prefetch = 0 : i64, scratch_operands = 0 : i64, tpu.core_type = #tpu.core_type<tc>, window_params = [{transform_indices = @transform_0, window_bounds = array<i64: 8, 32>}, {transform_indices = @transform_1, window_bounds = array<i64: 8, 32>}, {transform_indices = @transform_2, window_bounds = array<i64: 32, 32>}, {transform_indices = @transform_3, window_bounds = array<i64: 1, 32>}, {transform_indices = @transform_4, window_bounds = array<i64: 8, 32>}]} {
    %c0 = arith.constant 0 : index
    %c0_0 = arith.constant 0 : index
    %0 = vector.load %arg2[%c0, %c0_0] : memref<8x32xf32, #tpu.memory_space<vmem>>, vector<8x32xf32>
    %c0_1 = arith.constant 0 : index
    %c0_2 = arith.constant 0 : index
    %1 = vector.load %arg4[%c0_1, %c0_2] : memref<32x32xf32, #tpu.memory_space<vmem>>, vector<32x32xf32>
    %cst = arith.constant dense<0.000000e+00> : vector<8x32xf32>
    %2 = tpu.matmul %0, %1, %cst {dimension_numbers = #tpu.dot_dimension_numbers<[1], [0], [0], [1], [0, 0, 1, 1], [], []>} : vector<8x32xf32>, vector<32x32xf32>, vector<8x32xf32> -> vector<8x32xf32>
    %c0_3 = arith.constant 0 : index
    %c0_4 = arith.constant 0 : index
    %3 = vector.load %arg5[%c0_3, %c0_4] : memref<1x32xf32, #tpu.memory_space<vmem>>, vector<1x32xf32>
    %4 = vector.broadcast %3 : vector<1x32xf32> to vector<8x32xf32>
    %5 = arith.addf %2, %4 : vector<8x32xf32>
    %c0_5 = arith.constant 0 : index
    %c0_6 = arith.constant 0 : index
    %6 = vector.load %arg3[%c0_5, %c0_6] : memref<8x32xf32, #tpu.memory_space<vmem>>, vector<8x32xf32>
    %7 = arith.addf %5, %6 : vector<8x32xf32>
    %c0_7 = arith.constant 0 : index
    %c0_8 = arith.constant 0 : index
    %8 = vector.load %arg6[%c0_7, %c0_8] : memref<8x32xf32, #tpu.memory_space<vmem>>, vector<8x32xf32>
    tpu.vector_store %arg6[%c0_7, %c0_8], %7 {strides = array<i32>} : memref<8x32xf32, #tpu.memory_space<vmem>>, vector<8x32xf32>,
    return
  }
  func.func @transform_0(%arg0: i32, %arg1: i32) -> (i32, i32) {
    %c0_i32 = arith.constant 0 : i32
    %c0_i32_0 = arith.constant 0 : i32
    return %arg0, %c0_i32 : i32, i32
  }
  func.func @transform_1(%arg0: i32, %arg1: i32) -> (i32, i32) {
    %c0_i32 = arith.constant 0 : i32
    return %arg0, %arg1 : i32, i32
  }
  func.func @transform_2(%arg0: i32, %arg1: i32) -> (i32, i32) {
    %c0_i32 = arith.constant 0 : i32
    %c0_i32_0 = arith.constant 0 : i32
    return %c0_i32, %arg1 : i32, i32
  }
  func.func @transform_3(%arg0: i32, %arg1: i32) -> (i32, i32) {
    %c0_i32 = arith.constant 0 : i32
    %c0_i32_0 = arith.constant 0 : i32
    return %c0_i32, %arg1 : i32, i32
  }
  func.func @transform_4(%arg0: i32, %arg1: i32) -> (i32, i32) {
    %c0_i32 = arith.constant 0 : i32
    return %arg0, %arg1 : i32, i32
  }
}

module attributes {stable_mosaic.version = 11 : i64} {
  func.func @_ln_matmul_kernel(%arg0: i32, %arg1: i32, %arg2: memref<8x32xf32, #tpu.memory_space<vmem>>, %arg3: memref<1x32xf32, #tpu.memory_space<vmem>>, %arg4: memref<1x32xf32, #tpu.memory_space<vmem>>, %arg5: memref<32x96xf32, #tpu.memory_space<vmem>>, %arg6: memref<1x96xf32, #tpu.memory_space<vmem>>, %arg7: memref<8x96xf32, #tpu.memory_space<vmem>>) attributes {dimension_semantics = [#tpu.dimension_semantics<parallel>, #tpu.dimension_semantics<parallel>], iteration_bounds = array<i64: 2, 1>, scalar_prefetch = 0 : i64, scratch_operands = 0 : i64, tpu.core_type = #tpu.core_type<tc>, window_params = [{transform_indices = @transform_0, window_bounds = array<i64: 8, 32>}, {pipeline_mode = #tpu.pipeline_mode<synchronous>, transform_indices = @transform_1, window_bounds = array<i64: 1, 32>}, {pipeline_mode = #tpu.pipeline_mode<synchronous>, transform_indices = @transform_2, window_bounds = array<i64: 1, 32>}, {transform_indices = @transform_3, window_bounds = array<i64: 32, 96>}, {transform_indices = @transform_4, window_bounds = array<i64: 1, 96>}, {transform_indices = @transform_5, window_bounds = array<i64: 8, 96>}]} {
    %c0 = arith.constant 0 : index
    %c0_0 = arith.constant 0 : index
    %0 = vector.load %arg2[%c0, %c0_0] : memref<8x32xf32, #tpu.memory_space<vmem>>, vector<8x32xf32>
    %c0_1 = arith.constant 0 : index
    %c0_2 = arith.constant 0 : index
    %1 = vector.load %arg3[%c0_1, %c0_2] : memref<1x32xf32, #tpu.memory_space<vmem>>, vector<1x32xf32>
    %c0_3 = arith.constant 0 : index
    %c0_4 = arith.constant 0 : index
    %2 = vector.load %arg4[%c0_3, %c0_4] : memref<1x32xf32, #tpu.memory_space<vmem>>, vector<1x32xf32>
    %cst = arith.constant dense<0.000000e+00> : vector<8xf32>
    %3 = vector.multi_reduction <add>, %0, %cst [1] : vector<8x32xf32> to vector<8xf32>
    %4 = vector.shape_cast %3 : vector<8xf32> to vector<8x1xf32>
    %cst_5 = arith.constant 3.200000e+01 : f32
    %5 = vector.broadcast %cst_5 : f32 to vector<8x1xf32>
    %6 = arith.divf %4, %5 : vector<8x1xf32>
    %7 = vector.broadcast %6 : vector<8x1xf32> to vector<8x32xf32>
    %8 = arith.subf %0, %7 : vector<8x32xf32>
    %9 = arith.mulf %8, %8 : vector<8x32xf32>
    %cst_6 = arith.constant dense<0.000000e+00> : vector<8xf32>
    %10 = vector.multi_reduction <add>, %9, %cst_6 [1] : vector<8x32xf32> to vector<8xf32>
    %11 = vector.shape_cast %10 : vector<8xf32> to vector<8x1xf32>
    %cst_7 = arith.constant 3.200000e+01 : f32
    %12 = vector.broadcast %cst_7 : f32 to vector<8x1xf32>
    %13 = arith.divf %11, %12 : vector<8x1xf32>
    %cst_8 = arith.constant 9.99999974E-6 : f32
    %14 = vector.broadcast %cst_8 : f32 to vector<8x1xf32>
    %15 = arith.addf %13, %14 : vector<8x1xf32>
    %16 = math.rsqrt %15 : vector<8x1xf32>
    %17 = vector.broadcast %16 : vector<8x1xf32> to vector<8x32xf32>
    %18 = arith.mulf %8, %17 : vector<8x32xf32>
    %19 = vector.broadcast %1 : vector<1x32xf32> to vector<8x32xf32>
    %20 = arith.mulf %18, %19 : vector<8x32xf32>
    %21 = vector.broadcast %2 : vector<1x32xf32> to vector<8x32xf32>
    %22 = arith.addf %20, %21 : vector<8x32xf32>
    %c0_9 = arith.constant 0 : index
    %c0_10 = arith.constant 0 : index
    %23 = vector.load %arg5[%c0_9, %c0_10] : memref<32x96xf32, #tpu.memory_space<vmem>>, vector<32x96xf32>
    %cst_11 = arith.constant dense<0.000000e+00> : vector<8x96xf32>
    %24 = tpu.matmul %22, %23, %cst_11 {dimension_numbers = #tpu.dot_dimension_numbers<[1], [0], [0], [1], [0, 0, 1, 1], [], []>} : vector<8x32xf32>, vector<32x96xf32>, vector<8x96xf32> -> vector<8x96xf32>
    %c0_12 = arith.constant 0 : index
    %c0_13 = arith.constant 0 : index
    %25 = vector.load %arg6[%c0_12, %c0_13] : memref<1x96xf32, #tpu.memory_space<vmem>>, vector<1x96xf32>
    %26 = vector.broadcast %25 : vector<1x96xf32> to vector<8x96xf32>
    %27 = arith.addf %24, %26 : vector<8x96xf32>
    %c0_14 = arith.constant 0 : index
    %c0_15 = arith.constant 0 : index
    %28 = vector.load %arg7[%c0_14, %c0_15] : memref<8x96xf32, #tpu.memory_space<vmem>>, vector<8x96xf32>
    tpu.vector_store %arg7[%c0_14, %c0_15], %27 {strides = array<i32>} : memref<8x96xf32, #tpu.memory_space<vmem>>, vector<8x96xf32>,
    return
  }
  func.func @transform_0(%arg0: i32, %arg1: i32) -> (i32, i32) {
    %c0_i32 = arith.constant 0 : i32
    %c0_i32_0 = arith.constant 0 : i32
    return %arg0, %c0_i32 : i32, i32
  }
  func.func @transform_1(%arg0: i32, %arg1: i32) -> (i32, i32) {
    %c0_i32 = arith.constant 0 : i32
    %c0_i32_0 = arith.constant 0 : i32
    %c0_i32_1 = arith.constant 0 : i32
    return %c0_i32, %c0_i32_0 : i32, i32
  }
  func.func @transform_2(%arg0: i32, %arg1: i32) -> (i32, i32) {
    %c0_i32 = arith.constant 0 : i32
    %c0_i32_0 = arith.constant 0 : i32
    %c0_i32_1 = arith.constant 0 : i32
    return %c0_i32, %c0_i32_0 : i32, i32
  }
  func.func @transform_3(%arg0: i32, %arg1: i32) -> (i32, i32) {
    %c0_i32 = arith.constant 0 : i32
    %c0_i32_0 = arith.constant 0 : i32
    return %c0_i32, %arg1 : i32, i32
  }
  func.func @transform_4(%arg0: i32, %arg1: i32) -> (i32, i32) {
    %c0_i32 = arith.constant 0 : i32
    %c0_i32_0 = arith.constant 0 : i32
    return %c0_i32, %arg1 : i32, i32
  }
  func.func @transform_5(%arg0: i32, %arg1: i32) -> (i32, i32) {
    %c0_i32 = arith.constant 0 : i32
    return %arg0, %arg1 : i32, i32
  }
}

module attributes {stable_mosaic.version = 11 : i64} {
  func.func @_attention_kernel(%arg0: i32, %arg1: memref<8x96xf32, #tpu.memory_space<vmem>>, %arg2: memref<8x32xf32, #tpu.memory_space<vmem>>) attributes {dimension_semantics = [#tpu.dimension_semantics<parallel>], iteration_bounds = array<i64: 2>, scalar_prefetch = 0 : i64, scratch_operands = 0 : i64, tpu.core_type = #tpu.core_type<tc>, window_params = [{transform_indices = @transform_0, window_bounds = array<i64: 8, 96>}, {transform_indices = @transform_1, window_bounds = array<i64: 8, 32>}]} {
    %c0 = arith.constant 0 : index
    %c0_0 = arith.constant 0 : index
    %0 = vector.load %arg1[%c0, %c0_0] : memref<8x96xf32, #tpu.memory_space<vmem>>, vector<8x8xf32>
    %cst = arith.constant 0.176776692 : f32
    %1 = vector.broadcast %cst : f32 to vector<8x8xf32>
    %2 = arith.mulf %0, %1 : vector<8x8xf32>
    %c0_1 = arith.constant 0 : index
    %c32 = arith.constant 32 : index
    %3 = vector.load %arg1[%c0_1, %c32] : memref<8x96xf32, #tpu.memory_space<vmem>>, vector<8x8xf32>
    %c0_2 = arith.constant 0 : index
    %c64 = arith.constant 64 : index
    %4 = vector.load %arg1[%c0_2, %c64] : memref<8x96xf32, #tpu.memory_space<vmem>>, vector<8x8xf32>
    %cst_3 = arith.constant dense<0.000000e+00> : vector<8x8xf32>
    %5 = tpu.matmul %2, %3, %cst_3 {dimension_numbers = #tpu.dot_dimension_numbers<[1], [1], [0], [0], [0, 0, 1, 0], [], []>} : vector<8x8xf32>, vector<8x8xf32>, vector<8x8xf32> -> vector<8x8xf32>
    %cst_4 = arith.constant dense<0xFF800000> : vector<8xf32>
    %6 = vector.multi_reduction <maximumf>, %5, %cst_4 [1] : vector<8x8xf32> to vector<8xf32>
    %7 = vector.shape_cast %6 : vector<8xf32> to vector<8x1xf32>
    %8 = vector.broadcast %7 : vector<8x1xf32> to vector<8x8xf32>
    %9 = arith.subf %5, %8 : vector<8x8xf32>
    %10 = math.exp %9 : vector<8x8xf32>
    %cst_5 = arith.constant dense<0.000000e+00> : vector<8xf32>
    %11 = vector.multi_reduction <add>, %10, %cst_5 [1] : vector<8x8xf32> to vector<8xf32>
    %12 = vector.shape_cast %11 : vector<8xf32> to vector<8x1xf32>
    %13 = tpu.reciprocal %12 {approx = true} : vector<8x1xf32> -> vector<8x1xf32>
    %14 = vector.broadcast %13 : vector<8x1xf32> to vector<8x8xf32>
    %15 = arith.mulf %10, %14 : vector<8x8xf32>
    %cst_6 = arith.constant dense<0.000000e+00> : vector<8x8xf32>
    %16 = tpu.matmul %15, %4, %cst_6 {dimension_numbers = #tpu.dot_dimension_numbers<[1], [0], [0], [1], [0, 0, 1, 1], [], []>} : vector<8x8xf32>, vector<8x8xf32>, vector<8x8xf32> -> vector<8x8xf32>
    %c0_7 = arith.constant 0 : index
    %c8 = arith.constant 8 : index
    %17 = vector.load %arg1[%c0_7, %c8] : memref<8x96xf32, #tpu.memory_space<vmem>>, vector<8x8xf32>
    %cst_8 = arith.constant 0.176776692 : f32
    %18 = vector.broadcast %cst_8 : f32 to vector<8x8xf32>
    %19 = arith.mulf %17, %18 : vector<8x8xf32>
    %c0_9 = arith.constant 0 : index
    %c40 = arith.constant 40 : index
    %20 = vector.load %arg1[%c0_9, %c40] : memref<8x96xf32, #tpu.memory_space<vmem>>, vector<8x8xf32>
    %c0_10 = arith.constant 0 : index
    %c72 = arith.constant 72 : index
    %21 = vector.load %arg1[%c0_10, %c72] : memref<8x96xf32, #tpu.memory_space<vmem>>, vector<8x8xf32>
    %cst_11 = arith.constant dense<0.000000e+00> : vector<8x8xf32>
    %22 = tpu.matmul %19, %20, %cst_11 {dimension_numbers = #tpu.dot_dimension_numbers<[1], [1], [0], [0], [0, 0, 1, 0], [], []>} : vector<8x8xf32>, vector<8x8xf32>, vector<8x8xf32> -> vector<8x8xf32>
    %cst_12 = arith.constant dense<0xFF800000> : vector<8xf32>
    %23 = vector.multi_reduction <maximumf>, %22, %cst_12 [1] : vector<8x8xf32> to vector<8xf32>
    %24 = vector.shape_cast %23 : vector<8xf32> to vector<8x1xf32>
    %25 = vector.broadcast %24 : vector<8x1xf32> to vector<8x8xf32>
    %26 = arith.subf %22, %25 : vector<8x8xf32>
    %27 = math.exp %26 : vector<8x8xf32>
    %cst_13 = arith.constant dense<0.000000e+00> : vector<8xf32>
    %28 = vector.multi_reduction <add>, %27, %cst_13 [1] : vector<8x8xf32> to vector<8xf32>
    %29 = vector.shape_cast %28 : vector<8xf32> to vector<8x1xf32>
    %30 = tpu.reciprocal %29 {approx = true} : vector<8x1xf32> -> vector<8x1xf32>
    %31 = vector.broadcast %30 : vector<8x1xf32> to vector<8x8xf32>
    %32 = arith.mulf %27, %31 : vector<8x8xf32>
    %cst_14 = arith.constant dense<0.000000e+00> : vector<8x8xf32>
    %33 = tpu.matmul %32, %21, %cst_14 {dimension_numbers = #tpu.dot_dimension_numbers<[1], [0], [0], [1], [0, 0, 1, 1], [], []>} : vector<8x8xf32>, vector<8x8xf32>, vector<8x8xf32> -> vector<8x8xf32>
    %c0_15 = arith.constant 0 : index
    %c16 = arith.constant 16 : index
    %34 = vector.load %arg1[%c0_15, %c16] : memref<8x96xf32, #tpu.memory_space<vmem>>, vector<8x8xf32>
    %cst_16 = arith.constant 0.176776692 : f32
    %35 = vector.broadcast %cst_16 : f32 to vector<8x8xf32>
    %36 = arith.mulf %34, %35 : vector<8x8xf32>
    %c0_17 = arith.constant 0 : index
    %c48 = arith.constant 48 : index
    %37 = vector.load %arg1[%c0_17, %c48] : memref<8x96xf32, #tpu.memory_space<vmem>>, vector<8x8xf32>
    %c0_18 = arith.constant 0 : index
    %c80 = arith.constant 80 : index
    %38 = vector.load %arg1[%c0_18, %c80] : memref<8x96xf32, #tpu.memory_space<vmem>>, vector<8x8xf32>
    %cst_19 = arith.constant dense<0.000000e+00> : vector<8x8xf32>
    %39 = tpu.matmul %36, %37, %cst_19 {dimension_numbers = #tpu.dot_dimension_numbers<[1], [1], [0], [0], [0, 0, 1, 0], [], []>} : vector<8x8xf32>, vector<8x8xf32>, vector<8x8xf32> -> vector<8x8xf32>
    %cst_20 = arith.constant dense<0xFF800000> : vector<8xf32>
    %40 = vector.multi_reduction <maximumf>, %39, %cst_20 [1] : vector<8x8xf32> to vector<8xf32>
    %41 = vector.shape_cast %40 : vector<8xf32> to vector<8x1xf32>
    %42 = vector.broadcast %41 : vector<8x1xf32> to vector<8x8xf32>
    %43 = arith.subf %39, %42 : vector<8x8xf32>
    %44 = math.exp %43 : vector<8x8xf32>
    %cst_21 = arith.constant dense<0.000000e+00> : vector<8xf32>
    %45 = vector.multi_reduction <add>, %44, %cst_21 [1] : vector<8x8xf32> to vector<8xf32>
    %46 = vector.shape_cast %45 : vector<8xf32> to vector<8x1xf32>
    %47 = tpu.reciprocal %46 {approx = true} : vector<8x1xf32> -> vector<8x1xf32>
    %48 = vector.broadcast %47 : vector<8x1xf32> to vector<8x8xf32>
    %49 = arith.mulf %44, %48 : vector<8x8xf32>
    %cst_22 = arith.constant dense<0.000000e+00> : vector<8x8xf32>
    %50 = tpu.matmul %49, %38, %cst_22 {dimension_numbers = #tpu.dot_dimension_numbers<[1], [0], [0], [1], [0, 0, 1, 1], [], []>} : vector<8x8xf32>, vector<8x8xf32>, vector<8x8xf32> -> vector<8x8xf32>
    %c0_23 = arith.constant 0 : index
    %c24 = arith.constant 24 : index
    %51 = vector.load %arg1[%c0_23, %c24] : memref<8x96xf32, #tpu.memory_space<vmem>>, vector<8x8xf32>
    %cst_24 = arith.constant 0.176776692 : f32
    %52 = vector.broadcast %cst_24 : f32 to vector<8x8xf32>
    %53 = arith.mulf %51, %52 : vector<8x8xf32>
    %c0_25 = arith.constant 0 : index
    %c56 = arith.constant 56 : index
    %54 = vector.load %arg1[%c0_25, %c56] : memref<8x96xf32, #tpu.memory_space<vmem>>, vector<8x8xf32>
    %c0_26 = arith.constant 0 : index
    %c88 = arith.constant 88 : index
    %55 = vector.load %arg1[%c0_26, %c88] : memref<8x96xf32, #tpu.memory_space<vmem>>, vector<8x8xf32>
    %cst_27 = arith.constant dense<0.000000e+00> : vector<8x8xf32>
    %56 = tpu.matmul %53, %54, %cst_27 {dimension_numbers = #tpu.dot_dimension_numbers<[1], [1], [0], [0], [0, 0, 1, 0], [], []>} : vector<8x8xf32>, vector<8x8xf32>, vector<8x8xf32> -> vector<8x8xf32>
    %cst_28 = arith.constant dense<0xFF800000> : vector<8xf32>
    %57 = vector.multi_reduction <maximumf>, %56, %cst_28 [1] : vector<8x8xf32> to vector<8xf32>
    %58 = vector.shape_cast %57 : vector<8xf32> to vector<8x1xf32>
    %59 = vector.broadcast %58 : vector<8x1xf32> to vector<8x8xf32>
    %60 = arith.subf %56, %59 : vector<8x8xf32>
    %61 = math.exp %60 : vector<8x8xf32>
    %cst_29 = arith.constant dense<0.000000e+00> : vector<8xf32>
    %62 = vector.multi_reduction <add>, %61, %cst_29 [1] : vector<8x8xf32> to vector<8xf32>
    %63 = vector.shape_cast %62 : vector<8xf32> to vector<8x1xf32>
    %64 = tpu.reciprocal %63 {approx = true} : vector<8x1xf32> -> vector<8x1xf32>
    %65 = vector.broadcast %64 : vector<8x1xf32> to vector<8x8xf32>
    %66 = arith.mulf %61, %65 : vector<8x8xf32>
    %cst_30 = arith.constant dense<0.000000e+00> : vector<8x8xf32>
    %67 = tpu.matmul %66, %55, %cst_30 {dimension_numbers = #tpu.dot_dimension_numbers<[1], [0], [0], [1], [0, 0, 1, 1], [], []>} : vector<8x8xf32>, vector<8x8xf32>, vector<8x8xf32> -> vector<8x8xf32>
    %68 = tpu.concatenate %16, %33, %50, %67 in 1 : vector<8x8xf32>, vector<8x8xf32>, vector<8x8xf32>, vector<8x8xf32> -> vector<8x32xf32>
    %c0_31 = arith.constant 0 : index
    %c0_32 = arith.constant 0 : index
    %69 = vector.load %arg2[%c0_31, %c0_32] : memref<8x32xf32, #tpu.memory_space<vmem>>, vector<8x32xf32>
    tpu.vector_store %arg2[%c0_31, %c0_32], %68 {strides = array<i32>} : memref<8x32xf32, #tpu.memory_space<vmem>>, vector<8x32xf32>,
    return
  }
  func.func @transform_0(%arg0: i32) -> (i32, i32) {
    %c0_i32 = arith.constant 0 : i32
    %c0_i32_0 = arith.constant 0 : i32
    return %arg0, %c0_i32 : i32, i32
  }
  func.func @transform_1(%arg0: i32) -> (i32, i32) {
    %c0_i32 = arith.constant 0 : i32
    %c0_i32_0 = arith.constant 0 : i32
    return %arg0, %c0_i32 : i32, i32
  }
}

module attributes {stable_mosaic.version = 11 : i64} {
  func.func @_ln_mlp_residual_kernel(%arg0: i32, %arg1: i32, %arg2: memref<8x32xf32, #tpu.memory_space<vmem>>, %arg3: memref<1x32xf32, #tpu.memory_space<vmem>>, %arg4: memref<1x32xf32, #tpu.memory_space<vmem>>, %arg5: memref<32x64xf32, #tpu.memory_space<vmem>>, %arg6: memref<1x64xf32, #tpu.memory_space<vmem>>, %arg7: memref<64x32xf32, #tpu.memory_space<vmem>>, %arg8: memref<1x32xf32, #tpu.memory_space<vmem>>, %arg9: memref<8x32xf32, #tpu.memory_space<vmem>>, %arg10: memref<8x32xf32, #tpu.memory_space<vmem>>, %arg11: memref<8x32xf32, #tpu.memory_space<vmem>>) attributes {dimension_semantics = [#tpu.dimension_semantics<parallel>, #tpu.dimension_semantics<arbitrary>], iteration_bounds = array<i64: 2, 1>, scalar_prefetch = 0 : i64, scratch_operands = 2 : i64, tpu.core_type = #tpu.core_type<tc>, window_params = [{transform_indices = @transform_0, window_bounds = array<i64: 8, 32>}, {pipeline_mode = #tpu.pipeline_mode<synchronous>, transform_indices = @transform_1, window_bounds = array<i64: 1, 32>}, {pipeline_mode = #tpu.pipeline_mode<synchronous>, transform_indices = @transform_2, window_bounds = array<i64: 1, 32>}, {transform_indices = @transform_3, window_bounds = array<i64: 32, 64>}, {transform_indices = @transform_4, window_bounds = array<i64: 1, 64>}, {transform_indices = @transform_5, window_bounds = array<i64: 64, 32>}, {pipeline_mode = #tpu.pipeline_mode<synchronous>, transform_indices = @transform_6, window_bounds = array<i64: 1, 32>}, {transform_indices = @transform_7, window_bounds = array<i64: 8, 32>}]} {
    %c0_i32 = arith.constant 0 : i32
    %0 = arith.cmpi eq, %arg1, %c0_i32 : i32
    %1 = arith.extui %0 : i1 to i32
    %c0_i32_0 = arith.constant 0 : i32
    %2 = arith.cmpi ne, %1, %c0_i32_0 : i32
    scf.if %2 {
      %c0_19 = arith.constant 0 : index
      %c0_20 = arith.constant 0 : index
      %30 = vector.load %arg2[%c0_19, %c0_20] : memref<8x32xf32, #tpu.memory_space<vmem>>, vector<8x32xf32>
      %c0_21 = arith.constant 0 : index
      %c0_22 = arith.constant 0 : index
      %31 = vector.load %arg3[%c0_21, %c0_22] : memref<1x32xf32, #tpu.memory_space<vmem>>, vector<1x32xf32>
      %c0_23 = arith.constant 0 : index
      %c0_24 = arith.constant 0 : index
      %32 = vector.load %arg4[%c0_23, %c0_24] : memref<1x32xf32, #tpu.memory_space<vmem>>, vector<1x32xf32>
      %cst_25 = arith.constant dense<0.000000e+00> : vector<8xf32>
      %33 = vector.multi_reduction <add>, %30, %cst_25 [1] : vector<8x32xf32> to vector<8xf32>
      %34 = vector.shape_cast %33 : vector<8xf32> to vector<8x1xf32>
      %cst_26 = arith.constant 3.200000e+01 : f32
      %35 = vector.broadcast %cst_26 : f32 to vector<8x1xf32>
      %36 = arith.divf %34, %35 : vector<8x1xf32>
      %37 = vector.broadcast %36 : vector<8x1xf32> to vector<8x32xf32>
      %38 = arith.subf %30, %37 : vector<8x32xf32>
      %39 = arith.mulf %38, %38 : vector<8x32xf32>
      %cst_27 = arith.constant dense<0.000000e+00> : vector<8xf32>
      %40 = vector.multi_reduction <add>, %39, %cst_27 [1] : vector<8x32xf32> to vector<8xf32>
      %41 = vector.shape_cast %40 : vector<8xf32> to vector<8x1xf32>
      %cst_28 = arith.constant 3.200000e+01 : f32
      %42 = vector.broadcast %cst_28 : f32 to vector<8x1xf32>
      %43 = arith.divf %41, %42 : vector<8x1xf32>
      %cst_29 = arith.constant 9.99999974E-6 : f32
      %44 = vector.broadcast %cst_29 : f32 to vector<8x1xf32>
      %45 = arith.addf %43, %44 : vector<8x1xf32>
      %46 = math.rsqrt %45 : vector<8x1xf32>
      %47 = vector.broadcast %46 : vector<8x1xf32> to vector<8x32xf32>
      %48 = arith.mulf %38, %47 : vector<8x32xf32>
      %49 = vector.broadcast %31 : vector<1x32xf32> to vector<8x32xf32>
      %50 = arith.mulf %48, %49 : vector<8x32xf32>
      %51 = vector.broadcast %32 : vector<1x32xf32> to vector<8x32xf32>
      %52 = arith.addf %50, %51 : vector<8x32xf32>
      %c0_30 = arith.constant 0 : index
      %c0_31 = arith.constant 0 : index
      %53 = vector.load %arg10[%c0_30, %c0_31] : memref<8x32xf32, #tpu.memory_space<vmem>>, vector<8x32xf32>
      tpu.vector_store %arg10[%c0_30, %c0_31], %52 {strides = array<i32>} : memref<8x32xf32, #tpu.memory_space<vmem>>, vector<8x32xf32>,
      %cst_32 = arith.constant 0.000000e+00 : f32
      %54 = vector.broadcast %cst_32 : f32 to vector<8x32xf32>
      %c0_33 = arith.constant 0 : index
      %c0_34 = arith.constant 0 : index
      %55 = vector.load %arg11[%c0_33, %c0_34] : memref<8x32xf32, #tpu.memory_space<vmem>>, vector<8x32xf32>
      tpu.vector_store %arg11[%c0_33, %c0_34], %54 {strides = array<i32>} : memref<8x32xf32, #tpu.memory_space<vmem>>, vector<8x32xf32>,
    } else {
    }
    %c0 = arith.constant 0 : index
    %c0_1 = arith.constant 0 : index
    %3 = vector.load %arg10[%c0, %c0_1] : memref<8x32xf32, #tpu.memory_space<vmem>>, vector<8x32xf32>
    %c0_2 = arith.constant 0 : index
    %c0_3 = arith.constant 0 : index
    %4 = vector.load %arg5[%c0_2, %c0_3] : memref<32x64xf32, #tpu.memory_space<vmem>>, vector<32x64xf32>
    %cst = arith.constant dense<0.000000e+00> : vector<8x64xf32>
    %5 = tpu.matmul %3, %4, %cst {dimension_numbers = #tpu.dot_dimension_numbers<[1], [0], [0], [1], [0, 0, 1, 1], [], []>} : vector<8x32xf32>, vector<32x64xf32>, vector<8x64xf32> -> vector<8x64xf32>
    %c0_4 = arith.constant 0 : index
    %c0_5 = arith.constant 0 : index
    %6 = vector.load %arg6[%c0_4, %c0_5] : memref<1x64xf32, #tpu.memory_space<vmem>>, vector<1x64xf32>
    %7 = vector.broadcast %6 : vector<1x64xf32> to vector<8x64xf32>
    %8 = arith.addf %5, %7 : vector<8x64xf32>
    %cst_6 = arith.constant 5.000000e-01 : f32
    %9 = vector.broadcast %cst_6 : f32 to vector<8x64xf32>
    %10 = arith.mulf %9, %8 : vector<8x64xf32>
    %cst_7 = arith.constant 4.471500e-02 : f32
    %11 = vector.broadcast %cst_7 : f32 to vector<8x64xf32>
    %12 = arith.mulf %11, %8 : vector<8x64xf32>
    %13 = arith.mulf %12, %8 : vector<8x64xf32>
    %14 = arith.mulf %13, %8 : vector<8x64xf32>
    %15 = arith.addf %8, %14 : vector<8x64xf32>
    %cst_8 = arith.constant 0.797884583 : f32
    %16 = vector.broadcast %cst_8 : f32 to vector<8x64xf32>
    %17 = arith.mulf %16, %15 : vector<8x64xf32>
    %18 = math.tanh %17 : vector<8x64xf32>
    %cst_9 = arith.constant 1.000000e+00 : f32
    %19 = vector.broadcast %cst_9 : f32 to vector<8x64xf32>
    %20 = arith.addf %19, %18 : vector<8x64xf32>
    %21 = arith.mulf %10, %20 : vector<8x64xf32>
    %c0_10 = arith.constant 0 : index
    %c0_11 = arith.constant 0 : index
    %22 = vector.load %arg11[%c0_10, %c0_11] : memref<8x32xf32, #tpu.memory_space<vmem>>, vector<8x32xf32>
    %c0_12 = arith.constant 0 : index
    %c0_13 = arith.constant 0 : index
    %23 = vector.load %arg7[%c0_12, %c0_13] : memref<64x32xf32, #tpu.memory_space<vmem>>, vector<64x32xf32>
    %cst_14 = arith.constant dense<0.000000e+00> : vector<8x32xf32>
    %24 = tpu.matmul %21, %23, %cst_14 {dimension_numbers = #tpu.dot_dimension_numbers<[1], [0], [0], [1], [0, 0, 1, 1], [], []>} : vector<8x64xf32>, vector<64x32xf32>, vector<8x32xf32> -> vector<8x32xf32>
    %25 = arith.addf %22, %24 : vector<8x32xf32>
    %c0_15 = arith.constant 0 : index
    %c0_16 = arith.constant 0 : index
    %26 = vector.load %arg11[%c0_15, %c0_16] : memref<8x32xf32, #tpu.memory_space<vmem>>, vector<8x32xf32>
    tpu.vector_store %arg11[%c0_15, %c0_16], %25 {strides = array<i32>} : memref<8x32xf32, #tpu.memory_space<vmem>>, vector<8x32xf32>,
    %c0_i32_17 = arith.constant 0 : i32
    %27 = arith.cmpi eq, %arg1, %c0_i32_17 : i32
    %28 = arith.extui %27 : i1 to i32
    %c0_i32_18 = arith.constant 0 : i32
    %29 = arith.cmpi ne, %28, %c0_i32_18 : i32
    scf.if %29 {
      %c0_19 = arith.constant 0 : index
      %c0_20 = arith.constant 0 : index
      %30 = vector.load %arg11[%c0_19, %c0_20] : memref<8x32xf32, #tpu.memory_space<vmem>>, vector<8x32xf32>
      %c0_21 = arith.constant 0 : index
      %c0_22 = arith.constant 0 : index
      %31 = vector.load %arg8[%c0_21, %c0_22] : memref<1x32xf32, #tpu.memory_space<vmem>>, vector<1x32xf32>
      %32 = vector.broadcast %31 : vector<1x32xf32> to vector<8x32xf32>
      %33 = arith.addf %30, %32 : vector<8x32xf32>
      %c0_23 = arith.constant 0 : index
      %c0_24 = arith.constant 0 : index
      %34 = vector.load %arg2[%c0_23, %c0_24] : memref<8x32xf32, #tpu.memory_space<vmem>>, vector<8x32xf32>
      %35 = arith.addf %33, %34 : vector<8x32xf32>
      %c0_25 = arith.constant 0 : index
      %c0_26 = arith.constant 0 : index
      %36 = vector.load %arg9[%c0_25, %c0_26] : memref<8x32xf32, #tpu.memory_space<vmem>>, vector<8x32xf32>
      tpu.vector_store %arg9[%c0_25, %c0_26], %35 {strides = array<i32>} : memref<8x32xf32, #tpu.memory_space<vmem>>, vector<8x32xf32>,
    } else {
    }
    return
  }
  func.func @transform_0(%arg0: i32, %arg1: i32) -> (i32, i32) {
    %c0_i32 = arith.constant 0 : i32
    %c0_i32_0 = arith.constant 0 : i32
    return %arg0, %c0_i32 : i32, i32
  }
  func.func @transform_1(%arg0: i32, %arg1: i32) -> (i32, i32) {
    %c0_i32 = arith.constant 0 : i32
    %c0_i32_0 = arith.constant 0 : i32
    %c0_i32_1 = arith.constant 0 : i32
    return %c0_i32, %c0_i32_0 : i32, i32
  }
  func.func @transform_2(%arg0: i32, %arg1: i32) -> (i32, i32) {
    %c0_i32 = arith.constant 0 : i32
    %c0_i32_0 = arith.constant 0 : i32
    %c0_i32_1 = arith.constant 0 : i32
    return %c0_i32, %c0_i32_0 : i32, i32
  }
  func.func @transform_3(%arg0: i32, %arg1: i32) -> (i32, i32) {
    %c0_i32 = arith.constant 0 : i32
    %c0_i32_0 = arith.constant 0 : i32
    return %c0_i32, %arg1 : i32, i32
  }
  func.func @transform_4(%arg0: i32, %arg1: i32) -> (i32, i32) {
    %c0_i32 = arith.constant 0 : i32
    %c0_i32_0 = arith.constant 0 : i32
    return %c0_i32, %arg1 : i32, i32
  }
  func.func @transform_5(%arg0: i32, %arg1: i32) -> (i32, i32) {
    %c0_i32 = arith.constant 0 : i32
    %c0_i32_0 = arith.constant 0 : i32
    return %arg1, %c0_i32 : i32, i32
  }
  func.func @transform_6(%arg0: i32, %arg1: i32) -> (i32, i32) {
    %c0_i32 = arith.constant 0 : i32
    %c0_i32_0 = arith.constant 0 : i32
    %c0_i32_1 = arith.constant 0 : i32
    return %c0_i32, %c0_i32_0 : i32, i32
  }
  func.func @transform_7(%arg0: i32, %arg1: i32) -> (i32, i32) {
    %c0_i32 = arith.constant 0 : i32
    %c0_i32_0 = arith.constant 0 : i32
    return %arg0, %c0_i32 : i32, i32
  }
}

</mosaic_0001>

<llo_original>
// kernel: transformer_forward.10
$region0: #{transformer_forward.10}
  #allocation0 [shape = 'u32[]', space=smem, size = 0x4, offset = 0x4, fixed_abs, tag = 'smem constant byte address 0x4 - core index']
  #allocation1 [shape = 'u32[144,128]{1,0:T(1,128)}', space=vmem, size = 0x12000, scoped, tag = 'internal scratch']
  %s0 = inlined_call_operand.vmem [shape: f32[16,32], index: 0, kind: input, shape index: {}]
  %s1 = inlined_call_operand.vmem [shape: f32[16,32], index: 1, kind: input, shape index: {}, may-alias: {1,4}]
  %s2 = inlined_call_operand.vmem [shape: f32[32,32], index: 2, kind: input, shape index: {}]
  %s3 = inlined_call_operand.vmem [shape: f32[1,32], index: 3, kind: input, shape index: {}]
  %s4 = inlined_call_operand.vmem [shape: f32[16,32], index: 4, kind: output, shape index: {}, may-alias: {1,4}]
  %s5 = sld [smem:[#allocation0]]
  $region49: #{transformer_forward.10} parent=0
    _
  %s7 = ssub.s32 1, %s5
  %s8 = scalar_select 0, %s7, %s5
  loop: start=0, step=1, limit=4
  $region2: #{transformer_forward.10} parent=0 // loop_pre_header
    _
  $region3: #{transformer_forward.10} parent=0 // loop_header
    %s10 = sphi 0, %s14
    %p11 = scmp.ge.s32.totalorder %s10, 4
    %s17 = sphi 0, %s29
    %s18 = sphi 0, %s25
    %s19 = sphi 0, %s17
    %s20 = sphi 0, %s18
    %s21 = sphi 0, %s19
    %s22 = sphi 0, %s20
    %s32 = sphi 0, %s34
    %s35 = sphi 0, %s32
    %s36 = sphi 0, %s35
    %s52 = sphi 0, %s36
    %s60 = sphi 0, %s62
    %s63 = sphi 0, %s60
    %s64 = sphi 0, %s63
    %s80 = sphi 0, %s64
    %s86 = sphi 0, %s88
    %s89 = sphi 0, %s86
    %s90 = sphi 0, %s89
    %s106 = sphi 0, %s90
    %s112 = sphi 0, %s114
    %s115 = sphi 0, %s112
    %s116 = sphi 0, %s115
    %s132 = sphi 0, %s116
    %s140 = sphi 0, %s142
    %s143 = sphi 0, %s140
    %s144 = sphi 0, %s143
    %s160 = sphi 0, %s144
  $region4: #{transformer_forward.10} parent=0 // loop_header_branch
    %13 = sbr.rel (%p11) target = $region8
  $region5: #{transformer_forward.10} parent=0 // loop_body
    %s15 = ssub.s32 %s10, 1
    %s16 = ssub.s32 %s10, 2
    %s23 = sadd.s32 1, %s18
    %p24 = scmp.ge.s32.totalorder %s23, 1
    %s25 = scalar_select %p24, 0, %s23
    %s26 = sadd.s32 1, %s17
    %s27 = scalar_select %p24, %s26, %s17
    %p28 = scmp.ge.s32.totalorder %s27, 2
    %s29 = scalar_select %p28, 0, %s27
    %s30 = ssub.s32 %s17, %s29
    %p31 = scmp.eq.s32.totalorder %s30, 0
    %s33 = sadd.s32 %s32, 1
    %s34 = scalar_select %p31, %s32, %s33
    %p37 = pneg %p31
    %p38 = scmp.eq.s32.totalorder %s10, 1
    %p39 = por %p37, %p38
    %p40 = scmp.ne.s32.totalorder %s32, %s35
    %p41 = scmp.eq.s32.totalorder %s10, 0
    %p42 = por %p40, %p41
    %p43 = scmp.ne.s32.totalorder %s32, %s35
    %p44 = scmp.eq.s32.totalorder %s15, 1
    %p45 = por %p43, %p44
    %p46 = scmp.ne.s32.totalorder %s35, %s36
    %p47 = scmp.eq.s32.totalorder %s15, 0
    %p48 = por %p46, %p47
    %p49 = scmp.ne.s32.totalorder %s35, %s36
    %p50 = scmp.eq.s32.totalorder %s16, 1
    %p51 = por %p49, %p50
    %p53 = scmp.ne.s32.totalorder %s36, %s52
    %p54 = scmp.eq.s32.totalorder %s16, 0
    %p55 = por %p53, %p54
    %s56 = ssub.s32 %s17, %s29
    %s57 = ssub.s32 %s18, %s25
    %s58 = sor.u32 %s56, %s57
    %p59 = scmp.eq.s32.totalorder %s58, 0
    %s61 = sadd.s32 %s60, 1
    %s62 = scalar_select %p59, %s60, %s61
    %p65 = pneg %p59
    %p66 = scmp.eq.s32.totalorder %s10, 1
    %p67 = por %p65, %p66
    %p68 = scmp.ne.s32.totalorder %s60, %s63
    %p69 = scmp.eq.s32.totalorder %s10, 0
    %p70 = por %p68, %p69
    %p71 = scmp.ne.s32.totalorder %s60, %s63
    %p72 = scmp.eq.s32.totalorder %s15, 1
    %p73 = por %p71, %p72
    %p74 = scmp.ne.s32.totalorder %s63, %s64
    %p75 = scmp.eq.s32.totalorder %s15, 0
    %p76 = por %p74, %p75
    %p77 = scmp.ne.s32.totalorder %s63, %s64
    %p78 = scmp.eq.s32.totalorder %s16, 1
    %p79 = por %p77, %p78
    %p81 = scmp.ne.s32.totalorder %s64, %s80
    %p82 = scmp.eq.s32.totalorder %s16, 0
    %p83 = por %p81, %p82
    %s84 = ssub.s32 %s18, %s25
    %p85 = scmp.eq.s32.totalorder %s84, 0
    %s87 = sadd.s32 %s86, 1
    %s88 = scalar_select %p85, %s86, %s87
    %p91 = pneg %p85
    %p92 = scmp.eq.s32.totalorder %s10, 1
    %p93 = por %p91, %p92
    %p94 = scmp.ne.s32.totalorder %s86, %s89
    %p95 = scmp.eq.s32.totalorder %s10, 0
    %p96 = por %p94, %p95
    %p97 = scmp.ne.s32.totalorder %s86, %s89
    %p98 = scmp.eq.s32.totalorder %s15, 1
    %p99 = por %p97, %p98
    %p100 = scmp.ne.s32.totalorder %s89, %s90
    %p101 = scmp.eq.s32.totalorder %s15, 0
    %p102 = por %p100, %p101
    %p103 = scmp.ne.s32.totalorder %s89, %s90
    %p104 = scmp.eq.s32.totalorder %s16, 1
    %p105 = por %p103, %p104
    %p107 = scmp.ne.s32.totalorder %s90, %s106
    %p108 = scmp.eq.s32.totalorder %s16, 0
    %p109 = por %p107, %p108
    %s110 = ssub.s32 %s18, %s25
    %p111 = scmp.eq.s32.totalorder %s110, 0
    %s113 = sadd.s32 %s112, 1
    %s114 = scalar_select %p111, %s112, %s113
    %p117 = pneg %p111
    %p118 = scmp.eq.s32.totalorder %s10, 1
    %p119 = por %p117, %p118
    %p120 = scmp.ne.s32.totalorder %s112, %s115
    %p121 = scmp.eq.s32.totalorder %s10, 0
    %p122 = por %p120, %p121
    %p123 = scmp.ne.s32.totalorder %s112, %s115
    %p124 = scmp.eq.s32.totalorder %s15, 1
    %p125 = por %p123, %p124
    %p126 = scmp.ne.s32.totalorder %s115, %s116
    %p127 = scmp.eq.s32.totalorder %s15, 0
    %p128 = por %p126, %p127
    %p129 = scmp.ne.s32.totalorder %s115, %s116
    %p130 = scmp.eq.s32.totalorder %s16, 1
    %p131 = por %p129, %p130
    %p133 = scmp.ne.s32.totalorder %s116, %s132
    %p134 = scmp.eq.s32.totalorder %s16, 0
    %p135 = por %p133, %p134
    %s136 = ssub.s32 %s17, %s29
    %s137 = ssub.s32 %s18, %s25
    %s138 = sor.u32 %s136, %s137
    %p139 = scmp.eq.s32.totalorder %s138, 0
    %s141 = sadd.s32 %s140, 1
    %s142 = scalar_select %p139, %s140, %s141
    %p145 = pneg %p139
    %p146 = scmp.eq.s32.totalorder %s10, 1
    %p147 = por %p145, %p146
    %p148 = scmp.ne.s32.totalorder %s140, %s143
    %p149 = scmp.eq.s32.totalorder %s10, 0
    %p150 = por %p148, %p149
    %p151 = scmp.ne.s32.totalorder %s140, %s143
    %p152 = scmp.eq.s32.totalorder %s15, 1
    %p153 = por %p151, %p152
    %p154 = scmp.ne.s32.totalorder %s143, %s144
    %p155 = scmp.eq.s32.totalorder %s15, 0
    %p156 = por %p154, %p155
    %p157 = scmp.ne.s32.totalorder %s143, %s144
    %p158 = scmp.eq.s32.totalorder %s16, 1
    %p159 = por %p157, %p158
    %p161 = scmp.ne.s32.totalorder %s144, %s160
    %p162 = scmp.eq.s32.totalorder %s16, 0
    %p163 = por %p161, %p162
    %p164 = scmp.le.s32.totalorder 1, %s10
    %p165 = scmp.lt.s32.totalorder %s10, 3
    %p166 = pnand %p164, %p165
    %p167 = pneg %p166
    // Predicated region
    $region9: #{transformer_forward.10} parent=5 // pred_check
      _
    $region10: #{transformer_forward.10} parent=5 // pred_check_branch
      %169 = sbr.rel (%p166) target = $region12
    $region11: #{transformer_forward.10} parent=5 // pred_region
      %s170 = ssub.s32 %s10, 1
      // Predicated region
      $region13: #{transformer_forward.10} parent=11 // pred_check
        %p171 = pneg %p102
      $region14: #{transformer_forward.10} parent=11 // pred_check_branch
        %173 = sbr.rel (%p171) target = $region16
      $region15: #{transformer_forward.10} parent=11 // pred_region
        %p174 = scmp.lt.s32.totalorder %s20, 0
        %s175 = scalar_select %p174, %s20, 0
        %s176 = smul.addr %s175, 8
        %s177 = scalar_lea.vmem %s2, %s176
      $region16: #{transformer_forward.10} parent=11 // pred_fallthru
        _
      // Predicated region
      $region17: #{transformer_forward.10} parent=11 // pred_check
        %p178 = pneg %p128
      $region18: #{transformer_forward.10} parent=11 // pred_check_branch
        %180 = sbr.rel (%p178) target = $region20
      $region19: #{transformer_forward.10} parent=11 // pred_region
        %p181 = scmp.lt.s32.totalorder %s20, 0
        %s182 = scalar_select %p181, %s20, 0
        %s183 = scalar_lea.vmem %s3, %s182
      $region20: #{transformer_forward.10} parent=11 // pred_fallthru
        _
    $region12: #{transformer_forward.10} parent=5 // pred_fallthru
      _
    %p184 = scmp.lt.s32.totalorder %s10, 2
    // Predicated region
    $region21: #{transformer_forward.10} parent=5 // pred_check
      %p185 = pneg %p184
    $region22: #{transformer_forward.10} parent=5 // pred_check_branch
      %187 = sbr.rel (%p185) target = $region24
    $region23: #{transformer_forward.10} parent=5 // pred_region
      // Predicated region
      $region25: #{transformer_forward.10} parent=23 // pred_check
        %p188 = pneg %p42
      $region26: #{transformer_forward.10} parent=23 // pred_check_branch
        %190 = sbr.rel (%p188) target = $region28
      $region27: #{transformer_forward.10} parent=23 // pred_region
        %p191 = scmp.lt.s32.totalorder %s17, 1
        %s192 = scalar_select %p191, %s17, 1
        %s193 = smul.addr %s192, 8
        %s194 = scalar_lea.vmem %s0, %s193
      $region28: #{transformer_forward.10} parent=23 // pred_fallthru
        _
      // Predicated region
      $region29: #{transformer_forward.10} parent=23 // pred_check
        %p195 = pneg %p70
      $region30: #{transformer_forward.10} parent=23 // pred_check_branch
        %197 = sbr.rel (%p195) target = $region32
      $region31: #{transformer_forward.10} parent=23 // pred_region
        %p198 = scmp.lt.s32.totalorder %s17, 1
        %s199 = scalar_select %p198, %s17, 1
        %p200 = scmp.lt.s32.totalorder %s18, 0
        %s201 = scalar_select %p200, %s18, 0
        %s202 = sadd.s32 %s201, %s199
        %s203 = smul.addr %s202, 8
        %s204 = scalar_lea.vmem %s1, %s203
      $region32: #{transformer_forward.10} parent=23 // pred_fallthru
        _
    $region24: #{transformer_forward.10} parent=5 // pred_fallthru
      _
    %p205 = scmp.le.s32.totalorder 1, %s10
    %p206 = scmp.lt.s32.totalorder %s10, 3
    %p207 = pnand %p205, %p206
    %p208 = pneg %p207
    // Predicated region
    $region33: #{transformer_forward.10} parent=5 // pred_check
      _
    $region34: #{transformer_forward.10} parent=5 // pred_check_branch
      %210 = sbr.rel (%p207) target = $region36
    $region35: #{transformer_forward.10} parent=5 // pred_region
      %s211 = ssub.s32 %s10, 1
      %p212 = scmp.lt.s32.totalorder %s19, 1
      %s213 = scalar_select %p212, %s19, 1
      %s214 = smul.addr %s213, 8
      %s215 = scalar_lea.vmem %s0, %s214
      %p216 = pneg %p48
      %p217 = pneg %p45
      %p218 = scmp.lt.s32.totalorder %s19, 1
      %s219 = scalar_select %p218, %s19, 1
      %p220 = scmp.lt.s32.totalorder %s20, 0
      %s221 = scalar_select %p220, %s20, 0
      %s222 = sadd.s32 %s221, %s219
      %s223 = smul.addr %s222, 8
      %s224 = scalar_lea.vmem %s1, %s223
      %p225 = pneg %p76
      %p226 = pneg %p73
      %p227 = scmp.lt.s32.totalorder %s20, 0
      %s228 = scalar_select %p227, %s20, 0
      %s229 = smul.addr %s228, 8
      %s230 = scalar_lea.vmem %s2, %s229
      %p231 = pneg %p102
      %p232 = pneg %p99
      %p233 = scmp.lt.s32.totalorder %s20, 0
      %s234 = scalar_select %p233, %s20, 0
      %s235 = scalar_lea.vmem %s3, %s234
      %p236 = pneg %p128
      %p237 = pneg %p125
      %p238 = pneg %p156
      %p239 = pneg %p153
      %p240 = scmp.lt.s32.totalorder %s19, 1
      %s241 = scalar_select %p240, %s19, 1
      %p242 = scmp.lt.s32.totalorder %s20, 0
      %s243 = scalar_select %p242, %s20, 0
      %s244 = sadd.s32 %s243, %s241
      %s245 = smul.addr %s244, 8
      %s246 = scalar_lea.vmem %s4, %s245
      %p247 = scmp.lt.s32.totalorder %s19, 1
      %s248 = scalar_select %p247, %s19, 1
      %s249 = smul.addr %s248, 8
      %s250 = scalar_lea.vmem %s0, %s249
      %p251 = scmp.lt.s32.totalorder %s19, 1
      %s252 = scalar_select %p251, %s19, 1
      %p253 = scmp.lt.s32.totalorder %s20, 0
      %s254 = scalar_select %p253, %s20, 0
      %s255 = sadd.s32 %s254, %s252
      %s256 = smul.addr %s255, 8
      %s257 = scalar_lea.vmem %s1, %s256
      %p258 = scmp.lt.s32.totalorder %s20, 0
      %s259 = scalar_select %p258, %s20, 0
      %s260 = smul.addr %s259, 8
      %s261 = scalar_lea.vmem %s2, %s260
      %p262 = scmp.lt.s32.totalorder %s20, 0
      %s263 = scalar_select %p262, %s20, 0
      %s264 = scalar_lea.vmem %s3, %s263
      %p265 = scmp.lt.s32.totalorder %s19, 1
      %s266 = scalar_select %p265, %s19, 1
      %p267 = scmp.lt.s32.totalorder %s20, 0
      %s268 = scalar_select %p267, %s20, 0
      %s269 = sadd.s32 %s268, %s266
      %s270 = smul.addr %s269, 8
      %s271 = scalar_lea.vmem %s4, %s270
      %v272 = vld [vmem:[%s250] sm:$0xff]
      %v273 = vld [vmem:[%s261] sm:$0xff]
      %v274 = vld [vmem:[%s261 + $0x8] sm:$0xff]
      %v275 = vld [vmem:[%s261 + $0x10] sm:$0xff]
      %v276 = vld [vmem:[%s261 + $0x18] sm:$0xff]
      %v277 = vld [vmem:[%s264] sm:$0x1]
      %v279 = vlaneseq
      %v280 = vshrl.u32 %v279, 7
      %v281 = vsub.s32 0, %v280
      %v282 = vrot.slane %v277, %v281
      %vm284 = vcmask 261120
      %v286 = vsel %vm284, %v272, 0
      %288 = vmatprep.subr.mxu0 0.0
      %289 = vmatpush1.msra.mxu0 %v273
      %290 = vmatprep.subr.mxu0 0.0
      %291 = vmatpush1.msra.mxu0 %v274
      %292 = vmatprep.subr.mxu0 0.0
      %293 = vmatpush1.msra.mxu0 %v275
      %294 = vmatprep.subr.mxu0 0.0
      %295 = vmatpush1.msra.mxu0 %v276
      %296 = vmatprep.subr.mxu0 0.0
      %297 = vmatpush1.msra.mxu0 0.0
      %298 = vmatprep.subr.mxu0 0.0
      %299 = vmatpush1.msra.mxu0 0.0
      %300 = vmatprep.subr.mxu0 0.0
      %301 = vmatpush1.msra.mxu0 0.0
      %302 = vmatprep.subr.mxu0 0.0
      %303 = vmatpush1.msra.mxu0 0.0
      %304 = vmatprep.subr.mxu0 0.0
      %305 = vmatpush1.msra.mxu0 0.0
      %306 = vmatprep.subr.mxu0 0.0
      %307 = vmatpush1.msra.mxu0 0.0
      %308 = vmatprep.subr.mxu0 0.0
      %309 = vmatpush1.msra.mxu0 0.0
      %310 = vmatprep.subr.mxu0 0.0
      %311 = vmatpush1.msra.mxu0 0.0
      %312 = vmatprep.subr.mxu0 0.0
      %313 = vmatpush1.msra.mxu0 0.0
      %314 = vmatprep.subr.mxu0 0.0
      %315 = vmatpush1.msra.mxu0 0.0
      %316 = vmatprep.subr.mxu0 0.0
      %317 = vmatpush1.msra.mxu0 0.0
      %318 = vmatprep.subr.mxu0 0.0
      %319 = vmatpush1.msra.mxu0 0.0
      %320 = vmatprep.subr.mxu0 0.0
      %321 = vmatpush1.msra.mxu0 0.0
      %322 = vmatprep.subr.mxu0 0.0
      %323 = vmatpush1.msra.mxu0 0.0
      %324 = vmatprep.subr.mxu0 0.0
      %325 = vmatpush1.msra.mxu0 0.0
      %326 = vmatprep.subr.mxu0 0.0
      %327 = vmatpush1.msra.mxu0 0.0
      %328 = vmatprep.subr.mxu0 0.0
      %329 = vmatpush1.msra.mxu0 0.0
      %330 = vmatprep.subr.mxu0 0.0
      %331 = vmatpush1.msra.mxu0 0.0
      %332 = vmatprep.subr.mxu0 0.0
      %333 = vmatpush1.msra.mxu0 0.0
      %334 = vmatprep.subr.mxu0 0.0
      %335 = vmatpush1.msra.mxu0 0.0
      %336 = vmatprep.subr.mxu0 0.0
      %337 = vmatpush1.msra.mxu0 0.0
      %338 = vmatprep.subr.mxu0 0.0
      %339 = vmatpush1.msra.mxu0 0.0
      %340 = vmatprep.subr.mxu0 0.0
      %341 = vmatpush1.msra.mxu0 0.0
      %342 = vmatprep.subr.mxu0 0.0
      %343 = vmatpush1.msra.mxu0 0.0
      %344 = vmatprep.subr.mxu0 0.0
      %345 = vmatpush1.msra.mxu0 0.0
      %346 = vmatprep.subr.mxu0 0.0
      %347 = vmatpush1.msra.mxu0 0.0
      %348 = vmatprep.subr.mxu0 0.0
      %349 = vmatpush1.msra.mxu0 0.0
      %350 = vmatprep.subr.mxu0 0.0
      %351 = vmatpush1.msra.mxu0 0.0
      %352 = vmatprep.mubr.f32.mxu0 0.0
      %353 = vmatmul.mubr.f32.gmra.mrb[0].mxu0 %v286
      %v354 = vpop.f32.mrb[0].mxu0
      %v355 = vadd.f32 %v282, %v354
      %v356 = vpop.f32.mrb[0].mxu0
      %357 = vdwg.mxu0
      %v358 = vld [vmem:[%s257] sm:$0xff]
      %v359 = vadd.f32 %v355, %v358
      %360 = vst.msk [vmem:[%s271] sm:$0xff] %vm284, %v359
      %p361 = scmp.lt.s32.totalorder %s19, 1
      %s362 = scalar_select %p361, %s19, 1
      %p363 = scmp.lt.s32.totalorder %s20, 0
      %s364 = scalar_select %p363, %s20, 0
      %s365 = sadd.s32 %s364, %s362
      %s366 = smul.addr %s365, 8
      %s367 = scalar_lea.vmem %s4, %s366
      // Predicated region
      $region37: #{transformer_forward.10} parent=35 // pred_check
        %p368 = pneg %p153
      $region38: #{transformer_forward.10} parent=35 // pred_check_branch
        %370 = sbr.rel (%p368) target = $region40
      $region39: #{transformer_forward.10} parent=35 // pred_region
        _
      $region40: #{transformer_forward.10} parent=35 // pred_fallthru
        _
    $region36: #{transformer_forward.10} parent=5 // pred_fallthru
      _
    %p371 = scmp.le.s32.totalorder 2, %s10
    // Predicated region
    $region41: #{transformer_forward.10} parent=5 // pred_check
      %p372 = pneg %p371
    $region42: #{transformer_forward.10} parent=5 // pred_check_branch
      %374 = sbr.rel (%p372) target = $region44
    $region43: #{transformer_forward.10} parent=5 // pred_region
      %s375 = ssub.s32 %s10, 2
      // Predicated region
      $region45: #{transformer_forward.10} parent=43 // pred_check
        %p376 = pneg %p159
      $region46: #{transformer_forward.10} parent=43 // pred_check_branch
        %378 = sbr.rel (%p376) target = $region48
      $region47: #{transformer_forward.10} parent=43 // pred_region
        %p379 = scmp.lt.s32.totalorder %s21, 1
        %s380 = scalar_select %p379, %s21, 1
        %p381 = scmp.lt.s32.totalorder %s22, 0
        %s382 = scalar_select %p381, %s22, 0
        %s383 = sadd.s32 %s382, %s380
        %s384 = smul.addr %s383, 8
        %s385 = scalar_lea.vmem %s4, %s384
      $region48: #{transformer_forward.10} parent=43 // pred_fallthru
        _
    $region44: #{transformer_forward.10} parent=5 // pred_fallthru
      _
  $region6: #{transformer_forward.10} parent=0 // loop_footer
    %s14 = sadd.s32 1, %s10
  $region7: #{transformer_forward.10} parent=0 // loop_footer_branch
    %9 = sbr.rel target = $region3
  $region8: #{transformer_forward.10} parent=0 // loop_exit
    _

// kernel: transformer_forward.8
$region0: #{transformer_forward.8}
  #allocation0 [shape = 'u32[]', space=smem, size = 0x4, offset = 0x4, fixed_abs, tag = 'smem constant byte address 0x4 - core index']
  #allocation1 [shape = 'u32[144,128]{1,0:T(1,128)}', space=vmem, size = 0x12000, scoped, tag = 'internal scratch']
  %s0 = inlined_call_operand.vmem [shape: f32[16,32], index: 0, kind: input, shape index: {}]
  %s1 = inlined_call_operand.vmem [shape: f32[1,32], index: 1, kind: input, shape index: {}]
  %s2 = inlined_call_operand.vmem [shape: f32[1,32], index: 2, kind: input, shape index: {}]
  %s3 = inlined_call_operand.vmem [shape: f32[32,96], index: 3, kind: input, shape index: {}]
  %s4 = inlined_call_operand.vmem [shape: f32[1,96], index: 4, kind: input, shape index: {}]
  %s5 = inlined_call_operand.vmem [shape: f32[16,96], index: 5, kind: output, shape index: {}]
  %s6 = sld [smem:[#allocation0]]
  $region53: #{transformer_forward.8} parent=0
    _
  %s8 = ssub.s32 1, %s6
  %s9 = scalar_select 0, %s8, %s6
  loop: start=0, step=1, limit=4
  $region2: #{transformer_forward.8} parent=0 // loop_pre_header
    _
  $region3: #{transformer_forward.8} parent=0 // loop_header
    %s11 = sphi 0, %s15
    %p12 = scmp.ge.s32.totalorder %s11, 4
    %s18 = sphi 0, %s30
    %s19 = sphi 0, %s26
    %s20 = sphi 0, %s18
    %s21 = sphi 0, %s19
    %s22 = sphi 0, %s20
    %s23 = sphi 0, %s21
    %s33 = sphi 0, %s35
    %s36 = sphi 0, %s33
    %s37 = sphi 0, %s36
    %s53 = sphi 0, %s37
    %s57 = sphi 0, %s57
    %s59 = sphi 0, %s57
    %s60 = sphi 0, %s59
    %s74 = sphi 0, %s60
    %s78 = sphi 0, %s78
    %s80 = sphi 0, %s78
    %s81 = sphi 0, %s80
    %s95 = sphi 0, %s81
    %s101 = sphi 0, %s103
    %s104 = sphi 0, %s101
    %s105 = sphi 0, %s104
    %s121 = sphi 0, %s105
    %s127 = sphi 0, %s129
    %s130 = sphi 0, %s127
    %s131 = sphi 0, %s130
    %s147 = sphi 0, %s131
    %s155 = sphi 0, %s157
    %s158 = sphi 0, %s155
    %s159 = sphi 0, %s158
    %s175 = sphi 0, %s159
  $region4: #{transformer_forward.8} parent=0 // loop_header_branch
    %14 = sbr.rel (%p12) target = $region8
  $region5: #{transformer_forward.8} parent=0 // loop_body
    %s16 = ssub.s32 %s11, 1
    %s17 = ssub.s32 %s11, 2
    %s24 = sadd.s32 1, %s19
    %p25 = scmp.ge.s32.totalorder %s24, 1
    %s26 = scalar_select %p25, 0, %s24
    %s27 = sadd.s32 1, %s18
    %s28 = scalar_select %p25, %s27, %s18
    %p29 = scmp.ge.s32.totalorder %s28, 2
    %s30 = scalar_select %p29, 0, %s28
    %s31 = ssub.s32 %s18, %s30
    %p32 = scmp.eq.s32.totalorder %s31, 0
    %s34 = sadd.s32 %s33, 1
    %s35 = scalar_select %p32, %s33, %s34
    %p38 = pneg %p32
    %p39 = scmp.eq.s32.totalorder %s11, 1
    %p40 = por %p38, %p39
    %p41 = scmp.ne.s32.totalorder %s33, %s36
    %p42 = scmp.eq.s32.totalorder %s11, 0
    %p43 = por %p41, %p42
    %p44 = scmp.ne.s32.totalorder %s33, %s36
    %p45 = scmp.eq.s32.totalorder %s16, 1
    %p46 = por %p44, %p45
    %p47 = scmp.ne.s32.totalorder %s36, %s37
    %p48 = scmp.eq.s32.totalorder %s16, 0
    %p49 = por %p47, %p48
    %p50 = scmp.ne.s32.totalorder %s36, %s37
    %p51 = scmp.eq.s32.totalorder %s17, 1
    %p52 = por %p50, %p51
    %p54 = scmp.ne.s32.totalorder %s37, %s53
    %p55 = scmp.eq.s32.totalorder %s17, 0
    %p56 = por %p54, %p55
    %s58 = sadd.s32 %s57, 1
    %p61 = scmp.eq.s32.totalorder %s11, 1
    %p62 = scmp.ne.s32.totalorder %s57, %s59
    %p63 = scmp.eq.s32.totalorder %s11, 0
    %p64 = por %p62, %p63
    %p65 = scmp.ne.s32.totalorder %s57, %s59
    %p66 = scmp.eq.s32.totalorder %s16, 1
    %p67 = por %p65, %p66
    %p68 = scmp.ne.s32.totalorder %s59, %s60
    %p69 = scmp.eq.s32.totalorder %s16, 0
    %p70 = por %p68, %p69
    %p71 = scmp.ne.s32.totalorder %s59, %s60
    %p72 = scmp.eq.s32.totalorder %s17, 1
    %p73 = por %p71, %p72
    %p75 = scmp.ne.s32.totalorder %s60, %s74
    %p76 = scmp.eq.s32.totalorder %s17, 0
    %p77 = por %p75, %p76
    %s79 = sadd.s32 %s78, 1
    %p82 = scmp.eq.s32.totalorder %s11, 1
    %p83 = scmp.ne.s32.totalorder %s78, %s80
    %p84 = scmp.eq.s32.totalorder %s11, 0
    %p85 = por %p83, %p84
    %p86 = scmp.ne.s32.totalorder %s78, %s80
    %p87 = scmp.eq.s32.totalorder %s16, 1
    %p88 = por %p86, %p87
    %p89 = scmp.ne.s32.totalorder %s80, %s81
    %p90 = scmp.eq.s32.totalorder %s16, 0
    %p91 = por %p89, %p90
    %p92 = scmp.ne.s32.totalorder %s80, %s81
    %p93 = scmp.eq.s32.totalorder %s17, 1
    %p94 = por %p92, %p93
    %p96 = scmp.ne.s32.totalorder %s81, %s95
    %p97 = scmp.eq.s32.totalorder %s17, 0
    %p98 = por %p96, %p97
    %s99 = ssub.s32 %s19, %s26
    %p100 = scmp.eq.s32.totalorder %s99, 0
    %s102 = sadd.s32 %s101, 1
    %s103 = scalar_select %p100, %s101, %s102
    %p106 = pneg %p100
    %p107 = scmp.eq.s32.totalorder %s11, 1
    %p108 = por %p106, %p107
    %p109 = scmp.ne.s32.totalorder %s101, %s104
    %p110 = scmp.eq.s32.totalorder %s11, 0
    %p111 = por %p109, %p110
    %p112 = scmp.ne.s32.totalorder %s101, %s104
    %p113 = scmp.eq.s32.totalorder %s16, 1
    %p114 = por %p112, %p113
    %p115 = scmp.ne.s32.totalorder %s104, %s105
    %p116 = scmp.eq.s32.totalorder %s16, 0
    %p117 = por %p115, %p116
    %p118 = scmp.ne.s32.totalorder %s104, %s105
    %p119 = scmp.eq.s32.totalorder %s17, 1
    %p120 = por %p118, %p119
    %p122 = scmp.ne.s32.totalorder %s105, %s121
    %p123 = scmp.eq.s32.totalorder %s17, 0
    %p124 = por %p122, %p123
    %s125 = ssub.s32 %s19, %s26
    %p126 = scmp.eq.s32.totalorder %s125, 0
    %s128 = sadd.s32 %s127, 1
    %s129 = scalar_select %p126, %s127, %s128
    %p132 = pneg %p126
    %p133 = scmp.eq.s32.totalorder %s11, 1
    %p134 = por %p132, %p133
    %p135 = scmp.ne.s32.totalorder %s127, %s130
    %p136 = scmp.eq.s32.totalorder %s11, 0
    %p137 = por %p135, %p136
    %p138 = scmp.ne.s32.totalorder %s127, %s130
    %p139 = scmp.eq.s32.totalorder %s16, 1
    %p140 = por %p138, %p139
    %p141 = scmp.ne.s32.totalorder %s130, %s131
    %p142 = scmp.eq.s32.totalorder %s16, 0
    %p143 = por %p141, %p142
    %p144 = scmp.ne.s32.totalorder %s130, %s131
    %p145 = scmp.eq.s32.totalorder %s17, 1
    %p146 = por %p144, %p145
    %p148 = scmp.ne.s32.totalorder %s131, %s147
    %p149 = scmp.eq.s32.totalorder %s17, 0
    %p150 = por %p148, %p149
    %s151 = ssub.s32 %s18, %s30
    %s152 = ssub.s32 %s19, %s26
    %s153 = sor.u32 %s151, %s152
    %p154 = scmp.eq.s32.totalorder %s153, 0
    %s156 = sadd.s32 %s155, 1
    %s157 = scalar_select %p154, %s155, %s156
    %p160 = pneg %p154
    %p161 = scmp.eq.s32.totalorder %s11, 1
    %p162 = por %p160, %p161
    %p163 = scmp.ne.s32.totalorder %s155, %s158
    %p164 = scmp.eq.s32.totalorder %s11, 0
    %p165 = por %p163, %p164
    %p166 = scmp.ne.s32.totalorder %s155, %s158
    %p167 = scmp.eq.s32.totalorder %s16, 1
    %p168 = por %p166, %p167
    %p169 = scmp.ne.s32.totalorder %s158, %s159
    %p170 = scmp.eq.s32.totalorder %s16, 0
    %p171 = por %p169, %p170
    %p172 = scmp.ne.s32.totalorder %s158, %s159
    %p173 = scmp.eq.s32.totalorder %s17, 1
    %p174 = por %p172, %p173
    %p176 = scmp.ne.s32.totalorder %s159, %s175
    %p177 = scmp.eq.s32.totalorder %s17, 0
    %p178 = por %p176, %p177
    %p179 = scmp.le.s32.totalorder 1, %s11
    %p180 = scmp.lt.s32.totalorder %s11, 3
    %p181 = pnand %p179, %p180
    %p182 = pneg %p181
    // Predicated region
    $region9: #{transformer_forward.8} parent=5 // pred_check
      _
    $region10: #{transformer_forward.8} parent=5 // pred_check_branch
      %184 = sbr.rel (%p181) target = $region12
    $region11: #{transformer_forward.8} parent=5 // pred_region
      %s185 = ssub.s32 %s11, 1
      // Predicated region
      $region13: #{transformer_forward.8} parent=11 // pred_check
        %p186 = pneg %p70
      $region14: #{transformer_forward.8} parent=11 // pred_check_branch
        %188 = sbr.rel (%p186) target = $region16
      $region15: #{transformer_forward.8} parent=11 // pred_region
        _
      $region16: #{transformer_forward.8} parent=11 // pred_fallthru
        _
      // Predicated region
      $region17: #{transformer_forward.8} parent=11 // pred_check
        %p189 = pneg %p91
      $region18: #{transformer_forward.8} parent=11 // pred_check_branch
        %191 = sbr.rel (%p189) target = $region20
      $region19: #{transformer_forward.8} parent=11 // pred_region
        _
      $region20: #{transformer_forward.8} parent=11 // pred_fallthru
        _
      // Predicated region
      $region21: #{transformer_forward.8} parent=11 // pred_check
        %p192 = pneg %p117
      $region22: #{transformer_forward.8} parent=11 // pred_check_branch
        %194 = sbr.rel (%p192) target = $region24
      $region23: #{transformer_forward.8} parent=11 // pred_region
        %p195 = scmp.lt.s32.totalorder %s21, 0
        %s196 = scalar_select %p195, %s21, 0
        %s197 = smul.addr %s196, 8
        %s198 = scalar_lea.vmem %s3, %s197
      $region24: #{transformer_forward.8} parent=11 // pred_fallthru
        _
      // Predicated region
      $region25: #{transformer_forward.8} parent=11 // pred_check
        %p199 = pneg %p143
      $region26: #{transformer_forward.8} parent=11 // pred_check_branch
        %201 = sbr.rel (%p199) target = $region28
      $region27: #{transformer_forward.8} parent=11 // pred_region
        %p202 = scmp.lt.s32.totalorder %s21, 0
        %s203 = scalar_select %p202, %s21, 0
        %s204 = scalar_lea.vmem %s4, %s203
      $region28: #{transformer_forward.8} parent=11 // pred_fallthru
        _
    $region12: #{transformer_forward.8} parent=5 // pred_fallthru
      _
    %p205 = scmp.lt.s32.totalorder %s11, 2
    // Predicated region
    $region29: #{transformer_forward.8} parent=5 // pred_check
      %p206 = pneg %p205
    $region30: #{transformer_forward.8} parent=5 // pred_check_branch
      %208 = sbr.rel (%p206) target = $region32
    $region31: #{transformer_forward.8} parent=5 // pred_region
      // Predicated region
      $region33: #{transformer_forward.8} parent=31 // pred_check
        %p209 = pneg %p43
      $region34: #{transformer_forward.8} parent=31 // pred_check_branch
        %211 = sbr.rel (%p209) target = $region36
      $region35: #{transformer_forward.8} parent=31 // pred_region
        %p212 = scmp.lt.s32.totalorder %s18, 1
        %s213 = scalar_select %p212, %s18, 1
        %s214 = smul.addr %s213, 8
        %s215 = scalar_lea.vmem %s0, %s214
      $region36: #{transformer_forward.8} parent=31 // pred_fallthru
        _
    $region32: #{transformer_forward.8} parent=5 // pred_fallthru
      _
    %p216 = scmp.le.s32.totalorder 1, %s11
    %p217 = scmp.lt.s32.totalorder %s11, 3
    %p218 = pnand %p216, %p217
    %p219 = pneg %p218
    // Predicated region
    $region37: #{transformer_forward.8} parent=5 // pred_check
      _
    $region38: #{transformer_forward.8} parent=5 // pred_check_branch
      %221 = sbr.rel (%p218) target = $region40
    $region39: #{transformer_forward.8} parent=5 // pred_region
      %s222 = ssub.s32 %s11, 1
      %p223 = scmp.lt.s32.totalorder %s20, 1
      %s224 = scalar_select %p223, %s20, 1
      %s225 = smul.addr %s224, 8
      %s226 = scalar_lea.vmem %s0, %s225
      %p227 = pneg %p49
      %p228 = pneg %p46
      %p229 = pneg %p70
      %p230 = pneg %p67
      %p231 = pneg %p91
      %p232 = pneg %p88
      %p233 = scmp.lt.s32.totalorder %s21, 0
      %s234 = scalar_select %p233, %s21, 0
      %s235 = smul.addr %s234, 8
      %s236 = scalar_lea.vmem %s3, %s235
      %p237 = pneg %p117
      %p238 = pneg %p114
      %p239 = scmp.lt.s32.totalorder %s21, 0
      %s240 = scalar_select %p239, %s21, 0
      %s241 = scalar_lea.vmem %s4, %s240
      %p242 = pneg %p143
      %p243 = pneg %p140
      %p244 = pneg %p171
      %p245 = pneg %p168
      %p246 = scmp.lt.s32.totalorder %s20, 1
      %s247 = scalar_select %p246, %s20, 1
      %p248 = scmp.lt.s32.totalorder %s21, 0
      %s249 = scalar_select %p248, %s21, 0
      %s250 = sadd.s32 %s249, %s247
      %s251 = smul.addr %s250, 8
      %s252 = scalar_lea.vmem %s5, %s251
      %p253 = scmp.lt.s32.totalorder %s20, 1
      %s254 = scalar_select %p253, %s20, 1
      %s255 = smul.addr %s254, 8
      %s256 = scalar_lea.vmem %s0, %s255
      %p257 = scmp.lt.s32.totalorder %s21, 0
      %s258 = scalar_select %p257, %s21, 0
      %s259 = smul.addr %s258, 8
      %s260 = scalar_lea.vmem %s3, %s259
      %p261 = scmp.lt.s32.totalorder %s21, 0
      %s262 = scalar_select %p261, %s21, 0
      %s263 = scalar_lea.vmem %s4, %s262
      %p264 = scmp.lt.s32.totalorder %s20, 1
      %s265 = scalar_select %p264, %s20, 1
      %p266 = scmp.lt.s32.totalorder %s21, 0
      %s267 = scalar_select %p266, %s21, 0
      %s268 = sadd.s32 %s267, %s265
      %s269 = smul.addr %s268, 8
      %s270 = scalar_lea.vmem %s5, %s269
      %v271 = vld [vmem:[%s256] sm:$0xff]
      %v272 = vld [vmem:[%s1] sm:$0x1]
      %v273 = vld [vmem:[%s2] sm:$0x1]
      %vm274 = vcmask 261120
      %v275 = vsel %vm274, %v271, 0.0
      %276 = vadd.xlane.f32.xlu0 %v275
      %v277 = vpop.xlane.xlu0 %276
      %v278 = vrcp.pop 32.0
      %v279 = vmul.f32 %v277, %v278
      %v280 = vsub.f32 %v271, %v279
      %v281 = vmul.f32 %v280, %v280
      %v282 = vsel %vm274, %v281, 0.0
      %283 = vadd.xlane.f32.xlu0 %v282
      %v284 = vpop.xlane.xlu0 %283
      %v285 = vmul.f32 %v284, %v278
      %v286 = vadd.f32 %v285, 1e-05
      %v287 = vrsqrt.pop %v286
      %v288 = vmul.f32 %v280, %v287
      %v290 = vlaneseq
      %v291 = vshrl.u32 %v290, 7
      %v292 = vsub.s32 0, %v291
      %v293 = vrot.slane %v272, %v292
      %v295 = vmul.f32 %v288, %v293
      %v297 = vlaneseq
      %v298 = vshrl.u32 %v297, 7
      %v299 = vsub.s32 0, %v298
      %v300 = vrot.slane %v273, %v299
      %v302 = vadd.f32 %v295, %v300
      %v303 = vld [vmem:[%s260] sm:$0xff]
      %v304 = vld [vmem:[%s260 + $0x8] sm:$0xff]
      %v305 = vld [vmem:[%s260 + $0x10] sm:$0xff]
      %v306 = vld [vmem:[%s260 + $0x18] sm:$0xff]
      %v307 = vld [vmem:[%s263] sm:$0x1]
      %v309 = vlaneseq
      %v310 = vshrl.u32 %v309, 7
      %v311 = vsub.s32 0, %v310
      %v312 = vrot.slane %v307, %v311
      %v315 = vsel %vm274, %v302, 0
      %317 = vmatprep.subr.mxu0 0.0
      %318 = vmatpush1.msra.mxu0 %v303
      %319 = vmatprep.subr.mxu0 0.0
      %320 = vmatpush1.msra.mxu0 %v304
      %321 = vmatprep.subr.mxu0 0.0
      %322 = vmatpush1.msra.mxu0 %v305
      %323 = vmatprep.subr.mxu0 0.0
      %324 = vmatpush1.msra.mxu0 %v306
      %325 = vmatprep.subr.mxu0 0.0
      %326 = vmatpush1.msra.mxu0 0.0
      %327 = vmatprep.subr.mxu0 0.0
      %328 = vmatpush1.msra.mxu0 0.0
      %329 = vmatprep.subr.mxu0 0.0
      %330 = vmatpush1.msra.mxu0 0.0
      %331 = vmatprep.subr.mxu0 0.0
      %332 = vmatpush1.msra.mxu0 0.0
      %333 = vmatprep.subr.mxu0 0.0
      %334 = vmatpush1.msra.mxu0 0.0
      %335 = vmatprep.subr.mxu0 0.0
      %336 = vmatpush1.msra.mxu0 0.0
      %337 = vmatprep.subr.mxu0 0.0
      %338 = vmatpush1.msra.mxu0 0.0
      %339 = vmatprep.subr.mxu0 0.0
      %340 = vmatpush1.msra.mxu0 0.0
      %341 = vmatprep.subr.mxu0 0.0
      %342 = vmatpush1.msra.mxu0 0.0
      %343 = vmatprep.subr.mxu0 0.0
      %344 = vmatpush1.msra.mxu0 0.0
      %345 = vmatprep.subr.mxu0 0.0
      %346 = vmatpush1.msra.mxu0 0.0
      %347 = vmatprep.subr.mxu0 0.0
      %348 = vmatpush1.msra.mxu0 0.0
      %349 = vmatprep.subr.mxu0 0.0
      %350 = vmatpush1.msra.mxu0 0.0
      %351 = vmatprep.subr.mxu0 0.0
      %352 = vmatpush1.msra.mxu0 0.0
      %353 = vmatprep.subr.mxu0 0.0
      %354 = vmatpush1.msra.mxu0 0.0
      %355 = vmatprep.subr.mxu0 0.0
      %356 = vmatpush1.msra.mxu0 0.0
      %357 = vmatprep.subr.mxu0 0.0
      %358 = vmatpush1.msra.mxu0 0.0
      %359 = vmatprep.subr.mxu0 0.0
      %360 = vmatpush1.msra.mxu0 0.0
      %361 = vmatprep.subr.mxu0 0.0
      %362 = vmatpush1.msra.mxu0 0.0
      %363 = vmatprep.subr.mxu0 0.0
      %364 = vmatpush1.msra.mxu0 0.0
      %365 = vmatprep.subr.mxu0 0.0
      %366 = vmatpush1.msra.mxu0 0.0
      %367 = vmatprep.subr.mxu0 0.0
      %368 = vmatpush1.msra.mxu0 0.0
      %369 = vmatprep.subr.mxu0 0.0
      %370 = vmatpush1.msra.mxu0 0.0
      %371 = vmatprep.subr.mxu0 0.0
      %372 = vmatpush1.msra.mxu0 0.0
      %373 = vmatprep.subr.mxu0 0.0
      %374 = vmatpush1.msra.mxu0 0.0
      %375 = vmatprep.subr.mxu0 0.0
      %376 = vmatpush1.msra.mxu0 0.0
      %377 = vmatprep.subr.mxu0 0.0
      %378 = vmatpush1.msra.mxu0 0.0
      %379 = vmatprep.subr.mxu0 0.0
      %380 = vmatpush1.msra.mxu0 0.0
      %381 = vmatprep.mubr.f32.mxu0 0.0
      %382 = vmatmul.mubr.f32.gmra.mrb[0].mxu0 %v315
      %v383 = vpop.f32.mrb[0].mxu0
      %v384 = vadd.f32 %v312, %v383
      %v385 = vpop.f32.mrb[0].mxu0
      %386 = vdwg.mxu0
      %vm387 = vcmask 785408
      %388 = vst.msk [vmem:[%s270] sm:$0xff] %vm387, %v384
      %p389 = scmp.lt.s32.totalorder %s20, 1
      %s390 = scalar_select %p389, %s20, 1
      %p391 = scmp.lt.s32.totalorder %s21, 0
      %s392 = scalar_select %p391, %s21, 0
      %s393 = sadd.s32 %s392, %s390
      %s394 = smul.addr %s393, 8
      %s395 = scalar_lea.vmem %s5, %s394
      // Predicated region
      $region41: #{transformer_forward.8} parent=39 // pred_check
        %p396 = pneg %p168
      $region42: #{transformer_forward.8} parent=39 // pred_check_branch
        %398 = sbr.rel (%p396) target = $region44
      $region43: #{transformer_forward.8} parent=39 // pred_region
        _
      $region44: #{transformer_forward.8} parent=39 // pred_fallthru
        _
    $region40: #{transformer_forward.8} parent=5 // pred_fallthru
      _
    %p399 = scmp.le.s32.totalorder 2, %s11
    // Predicated region
    $region45: #{transformer_forward.8} parent=5 // pred_check
      %p400 = pneg %p399
    $region46: #{transformer_forward.8} parent=5 // pred_check_branch
      %402 = sbr.rel (%p400) target = $region48
    $region47: #{transformer_forward.8} parent=5 // pred_region
      %s403 = ssub.s32 %s11, 2
      // Predicated region
      $region49: #{transformer_forward.8} parent=47 // pred_check
        %p404 = pneg %p174
      $region50: #{transformer_forward.8} parent=47 // pred_check_branch
        %406 = sbr.rel (%p404) target = $region52
      $region51: #{transformer_forward.8} parent=47 // pred_region
        %p407 = scmp.lt.s32.totalorder %s22, 1
        %s408 = scalar_select %p407, %s22, 1
        %p409 = scmp.lt.s32.totalorder %s23, 0
        %s410 = scalar_select %p409, %s23, 0
        %s411 = sadd.s32 %s410, %s408
        %s412 = smul.addr %s411, 8
        %s413 = scalar_lea.vmem %s5, %s412
      $region52: #{transformer_forward.8} parent=47 // pred_fallthru
        _
    $region48: #{transformer_forward.8} parent=5 // pred_fallthru
      _
  $region6: #{transformer_forward.8} parent=0 // loop_footer
    %s15 = sadd.s32 1, %s11
  $region7: #{transformer_forward.8} parent=0 // loop_footer_branch
    %10 = sbr.rel target = $region3
  $region8: #{transformer_forward.8} parent=0 // loop_exit
    _

// kernel: transformer_forward.9
$region0: #{transformer_forward.9}
  #allocation0 [shape = 'u32[]', space=smem, size = 0x4, offset = 0x4, fixed_abs, tag = 'smem constant byte address 0x4 - core index']
  #allocation1 [shape = 'u32[144,128]{1,0:T(1,128)}', space=vmem, size = 0x12000, scoped, tag = 'internal scratch']
  %s0 = inlined_call_operand.vmem [shape: f32[16,96], index: 0, kind: input, shape index: {}]
  %s1 = inlined_call_operand.vmem [shape: f32[16,32], index: 1, kind: output, shape index: {}]
  %s2 = sld [smem:[#allocation0]]
  $region37: #{transformer_forward.9} parent=0
    _
  %s4 = ssub.s32 1, %s2
  %s5 = scalar_select 0, %s4, %s2
  loop: start=0, step=1, limit=4
  $region2: #{transformer_forward.9} parent=0 // loop_pre_header
    _
  $region3: #{transformer_forward.9} parent=0 // loop_header
    %s7 = sphi 0, %s11
    %p8 = scmp.ge.s32.totalorder %s7, 4
    %s17 = sphi 0, %s19
    %s20 = sphi 0, %s17
    %s21 = sphi 0, %s20
    %s37 = sphi 0, %s21
    %s43 = sphi 0, %s45
    %s46 = sphi 0, %s43
    %s47 = sphi 0, %s46
    %s63 = sphi 0, %s47
  $region4: #{transformer_forward.9} parent=0 // loop_header_branch
    %10 = sbr.rel (%p8) target = $region8
  $region5: #{transformer_forward.9} parent=0 // loop_body
    %s12 = ssub.s32 %s7, 1
    %s13 = ssub.s32 %s7, 2
    %s14 = sadd.s32 %s7, 1
    %s15 = ssub.s32 %s7, %s14
    %p16 = scmp.eq.s32.totalorder %s15, 0
    %s18 = sadd.s32 %s17, 1
    %s19 = scalar_select %p16, %s17, %s18
    %p22 = pneg %p16
    %p23 = scmp.eq.s32.totalorder %s7, 1
    %p24 = por %p22, %p23
    %p25 = scmp.ne.s32.totalorder %s17, %s20
    %p26 = scmp.eq.s32.totalorder %s7, 0
    %p27 = por %p25, %p26
    %p28 = scmp.ne.s32.totalorder %s17, %s20
    %p29 = scmp.eq.s32.totalorder %s12, 1
    %p30 = por %p28, %p29
    %p31 = scmp.ne.s32.totalorder %s20, %s21
    %p32 = scmp.eq.s32.totalorder %s12, 0
    %p33 = por %p31, %p32
    %p34 = scmp.ne.s32.totalorder %s20, %s21
    %p35 = scmp.eq.s32.totalorder %s13, 1
    %p36 = por %p34, %p35
    %p38 = scmp.ne.s32.totalorder %s21, %s37
    %p39 = scmp.eq.s32.totalorder %s13, 0
    %p40 = por %p38, %p39
    %s41 = ssub.s32 %s7, %s14
    %p42 = scmp.eq.s32.totalorder %s41, 0
    %s44 = sadd.s32 %s43, 1
    %s45 = scalar_select %p42, %s43, %s44
    %p48 = pneg %p42
    %p49 = scmp.eq.s32.totalorder %s7, 1
    %p50 = por %p48, %p49
    %p51 = scmp.ne.s32.totalorder %s43, %s46
    %p52 = scmp.eq.s32.totalorder %s7, 0
    %p53 = por %p51, %p52
    %p54 = scmp.ne.s32.totalorder %s43, %s46
    %p55 = scmp.eq.s32.totalorder %s12, 1
    %p56 = por %p54, %p55
    %p57 = scmp.ne.s32.totalorder %s46, %s47
    %p58 = scmp.eq.s32.totalorder %s12, 0
    %p59 = por %p57, %p58
    %p60 = scmp.ne.s32.totalorder %s46, %s47
    %p61 = scmp.eq.s32.totalorder %s13, 1
    %p62 = por %p60, %p61
    %p64 = scmp.ne.s32.totalorder %s47, %s63
    %p65 = scmp.eq.s32.totalorder %s13, 0
    %p66 = por %p64, %p65
    %p67 = scmp.le.s32.totalorder 1, %s7
    %p68 = scmp.lt.s32.totalorder %s7, 3
    %p69 = pnand %p67, %p68
    %p70 = pneg %p69
    // Predicated region
    $region9: #{transformer_forward.9} parent=5 // pred_check
      _
    $region10: #{transformer_forward.9} parent=5 // pred_check_branch
      %72 = sbr.rel (%p69) target = $region12
    $region11: #{transformer_forward.9} parent=5 // pred_region
      %s73 = ssub.s32 %s7, 1
    $region12: #{transformer_forward.9} parent=5 // pred_fallthru
      _
    %p74 = scmp.lt.s32.totalorder %s7, 2
    // Predicated region
    $region13: #{transformer_forward.9} parent=5 // pred_check
      %p75 = pneg %p74
    $region14: #{transformer_forward.9} parent=5 // pred_check_branch
      %77 = sbr.rel (%p75) target = $region16
    $region15: #{transformer_forward.9} parent=5 // pred_region
      // Predicated region
      $region17: #{transformer_forward.9} parent=15 // pred_check
        %p78 = pneg %p27
      $region18: #{transformer_forward.9} parent=15 // pred_check_branch
        %80 = sbr.rel (%p78) target = $region20
      $region19: #{transformer_forward.9} parent=15 // pred_region
        %p81 = scmp.lt.s32.totalorder %s7, 1
        %s82 = scalar_select %p81, %s7, 1
        %s83 = smul.addr %s82, 8
        %s84 = scalar_lea.vmem %s0, %s83
      $region20: #{transformer_forward.9} parent=15 // pred_fallthru
        _
    $region16: #{transformer_forward.9} parent=5 // pred_fallthru
      _
    %p85 = scmp.le.s32.totalorder 1, %s7
    %p86 = scmp.lt.s32.totalorder %s7, 3
    %p87 = pnand %p85, %p86
    %p88 = pneg %p87
    // Predicated region
    $region21: #{transformer_forward.9} parent=5 // pred_check
      _
    $region22: #{transformer_forward.9} parent=5 // pred_check_branch
      %90 = sbr.rel (%p87) target = $region24
    $region23: #{transformer_forward.9} parent=5 // pred_region
      %s91 = ssub.s32 %s7, 1
      %p92 = scmp.lt.s32.totalorder %s12, 1
      %s93 = scalar_select %p92, %s12, 1
      %s94 = smul.addr %s93, 8
      %s95 = scalar_lea.vmem %s0, %s94
      %p96 = pneg %p33
      %p97 = pneg %p30
      %p98 = pneg %p59
      %p99 = pneg %p56
      %p100 = scmp.lt.s32.totalorder %s12, 1
      %s101 = scalar_select %p100, %s12, 1
      %s102 = smul.addr %s101, 8
      %s103 = scalar_lea.vmem %s1, %s102
      %p104 = scmp.lt.s32.totalorder %s12, 1
      %s105 = scalar_select %p104, %s12, 1
      %s106 = smul.addr %s105, 8
      %s107 = scalar_lea.vmem %s0, %s106
      %p108 = scmp.lt.s32.totalorder %s12, 1
      %s109 = scalar_select %p108, %s12, 1
      %s110 = smul.addr %s109, 8
      %s111 = scalar_lea.vmem %s1, %s110
      %v112 = vld [vmem:[%s107] sm:$0xff]
      %v113 = vmul.f32 %v112, 0.17677669
      %115 = vrot.lane.b32.xlu0 %v112, 96
      %v116 = vpop.permute.xlu0 %115
      %vm117 = vcmask 64512
      %v119 = vsel %vm117, %v113, 0
      %v121 = vsel %vm117, %v116, 0
      %123 = vmatprep.subr.mxu0 0.0
      %124 = vmatpush1.xpose.msra.mxu0 %v121
      %125 = vmatprep.subr.mxu0 0.0
      %126 = vmatpush1.xpose.msra.mxu0 0.0
      %127 = vmatprep.subr.mxu0 0.0
      %128 = vmatpush1.xpose.msra.mxu0 0.0
      %129 = vmatprep.subr.mxu0 0.0
      %130 = vmatpush1.xpose.msra.mxu0 0.0
      %131 = vmatprep.subr.mxu0 0.0
      %132 = vmatpush1.xpose.msra.mxu0 0.0
      %133 = vmatprep.subr.mxu0 0.0
      %134 = vmatpush1.xpose.msra.mxu0 0.0
      %135 = vmatprep.subr.mxu0 0.0
      %136 = vmatpush1.xpose.msra.mxu0 0.0
      %137 = vmatprep.subr.mxu0 0.0
      %138 = vmatpush1.xpose.msra.mxu0 0.0
      %139 = vmatprep.subr.mxu0 0.0
      %140 = vmatpush1.xpose.msra.mxu0 0.0
      %141 = vmatprep.subr.mxu0 0.0
      %142 = vmatpush1.xpose.msra.mxu0 0.0
      %143 = vmatprep.subr.mxu0 0.0
      %144 = vmatpush1.xpose.msra.mxu0 0.0
      %145 = vmatprep.subr.mxu0 0.0
      %146 = vmatpush1.xpose.msra.mxu0 0.0
      %147 = vmatprep.subr.mxu0 0.0
      %148 = vmatpush1.xpose.msra.mxu0 0.0
      %149 = vmatprep.subr.mxu0 0.0
      %150 = vmatpush1.xpose.msra.mxu0 0.0
      %151 = vmatprep.subr.mxu0 0.0
      %152 = vmatpush1.xpose.msra.mxu0 0.0
      %153 = vmatprep.subr.mxu0 0.0
      %154 = vmatpush1.xpose.msra.mxu0 0.0
      %155 = vmatprep.subr.mxu0 0.0
      %156 = vmatpush1.xpose.msra.mxu0 0.0
      %157 = vmatprep.subr.mxu0 0.0
      %158 = vmatpush1.xpose.msra.mxu0 0.0
      %159 = vmatprep.subr.mxu0 0.0
      %160 = vmatpush1.xpose.msra.mxu0 0.0
      %161 = vmatprep.subr.mxu0 0.0
      %162 = vmatpush1.xpose.msra.mxu0 0.0
      %163 = vmatprep.subr.mxu0 0.0
      %164 = vmatpush1.xpose.msra.mxu0 0.0
      %165 = vmatprep.subr.mxu0 0.0
      %166 = vmatpush1.xpose.msra.mxu0 0.0
      %167 = vmatprep.subr.mxu0 0.0
      %168 = vmatpush1.xpose.msra.mxu0 0.0
      %169 = vmatprep.subr.mxu0 0.0
      %170 = vmatpush1.xpose.msra.mxu0 0.0
      %171 = vmatprep.subr.mxu0 0.0
      %172 = vmatpush1.xpose.msra.mxu0 0.0
      %173 = vmatprep.subr.mxu0 0.0
      %174 = vmatpush1.xpose.msra.mxu0 0.0
      %175 = vmatprep.subr.mxu0 0.0
      %176 = vmatpush1.xpose.msra.mxu0 0.0
      %177 = vmatprep.subr.mxu0 0.0
      %178 = vmatpush1.xpose.msra.mxu0 0.0
      %179 = vmatprep.subr.mxu0 0.0
      %180 = vmatpush1.xpose.msra.mxu0 0.0
      %181 = vmatprep.subr.mxu0 0.0
      %182 = vmatpush1.xpose.msra.mxu0 0.0
      %183 = vmatprep.subr.mxu0 0.0
      %184 = vmatpush1.xpose.msra.mxu0 0.0
      %185 = vmatprep.subr.mxu0 0.0
      %186 = vmatpush1.xpose.msra.mxu0 0.0
      %187 = vmatprep.mubr.f32.mxu0 0.0
      %188 = vmatmul.mubr.f32.gmra.mrb[0].mxu0 %v119
      %v189 = vpop.f32.mrb[0].mxu0
      %v190 = vadd.f32 0.0, %v189
      %v191 = vpop.f32.mrb[0].mxu0
      %192 = vdwg.mxu0
      %v193 = vsel %vm117, %v190, -inf
      %194 = vmax.xlane.f32.xlu0 %v193
      %v195 = vpop.xlane.xlu0 %194
      %v196 = vsub.f32 %v190, %v195
      %v197 = vmul.f32 %v196, 1.442695
      %v198 = vpow.pop %v197
      %v199 = vsel %vm117, %v198, 0.0
      %200 = vadd.xlane.f32.xlu0 %v199
      %v201 = vpop.xlane.xlu0 %200
      %v202 = vrcp.pop %v201
      %v203 = vmul.f32 %v198, %v202
      %204 = vrot.lane.b32.xlu0 %v112, 64
      %v205 = vpop.permute.xlu0 %204
      %v208 = vsel %vm117, %v203, 0
      %210 = vmatprep.subr.mxu0 0.0
      %211 = vmatpush1.msra.mxu0 %v205
      %212 = vmatprep.subr.mxu0 0.0
      %213 = vmatpush1.msra.mxu0 0.0
      %214 = vmatprep.subr.mxu0 0.0
      %215 = vmatpush1.msra.mxu0 0.0
      %216 = vmatprep.subr.mxu0 0.0
      %217 = vmatpush1.msra.mxu0 0.0
      %218 = vmatprep.subr.mxu0 0.0
      %219 = vmatpush1.msra.mxu0 0.0
      %220 = vmatprep.subr.mxu0 0.0
      %221 = vmatpush1.msra.mxu0 0.0
      %222 = vmatprep.subr.mxu0 0.0
      %223 = vmatpush1.msra.mxu0 0.0
      %224 = vmatprep.subr.mxu0 0.0
      %225 = vmatpush1.msra.mxu0 0.0
      %226 = vmatprep.subr.mxu0 0.0
      %227 = vmatpush1.msra.mxu0 0.0
      %228 = vmatprep.subr.mxu0 0.0
      %229 = vmatpush1.msra.mxu0 0.0
      %230 = vmatprep.subr.mxu0 0.0
      %231 = vmatpush1.msra.mxu0 0.0
      %232 = vmatprep.subr.mxu0 0.0
      %233 = vmatpush1.msra.mxu0 0.0
      %234 = vmatprep.subr.mxu0 0.0
      %235 = vmatpush1.msra.mxu0 0.0
      %236 = vmatprep.subr.mxu0 0.0
      %237 = vmatpush1.msra.mxu0 0.0
      %238 = vmatprep.subr.mxu0 0.0
      %239 = vmatpush1.msra.mxu0 0.0
      %240 = vmatprep.subr.mxu0 0.0
      %241 = vmatpush1.msra.mxu0 0.0
      %242 = vmatprep.subr.mxu0 0.0
      %243 = vmatpush1.msra.mxu0 0.0
      %244 = vmatprep.subr.mxu0 0.0
      %245 = vmatpush1.msra.mxu0 0.0
      %246 = vmatprep.subr.mxu0 0.0
      %247 = vmatpush1.msra.mxu0 0.0
      %248 = vmatprep.subr.mxu0 0.0
      %249 = vmatpush1.msra.mxu0 0.0
      %250 = vmatprep.subr.mxu0 0.0
      %251 = vmatpush1.msra.mxu0 0.0
      %252 = vmatprep.subr.mxu0 0.0
      %253 = vmatpush1.msra.mxu0 0.0
      %254 = vmatprep.subr.mxu0 0.0
      %255 = vmatpush1.msra.mxu0 0.0
      %256 = vmatprep.subr.mxu0 0.0
      %257 = vmatpush1.msra.mxu0 0.0
      %258 = vmatprep.subr.mxu0 0.0
      %259 = vmatpush1.msra.mxu0 0.0
      %260 = vmatprep.subr.mxu0 0.0
      %261 = vmatpush1.msra.mxu0 0.0
      %262 = vmatprep.subr.mxu0 0.0
      %263 = vmatpush1.msra.mxu0 0.0
      %264 = vmatprep.subr.mxu0 0.0
      %265 = vmatpush1.msra.mxu0 0.0
      %266 = vmatprep.subr.mxu0 0.0
      %267 = vmatpush1.msra.mxu0 0.0
      %268 = vmatprep.subr.mxu0 0.0
      %269 = vmatpush1.msra.mxu0 0.0
      %270 = vmatprep.subr.mxu0 0.0
      %271 = vmatpush1.msra.mxu0 0.0
      %272 = vmatprep.subr.mxu0 0.0
      %273 = vmatpush1.msra.mxu0 0.0
      %274 = vmatprep.mubr.f32.mxu0 0.0
      %275 = vmatmul.mubr.f32.gmra.mrb[0].mxu0 %v208
      %v276 = vpop.f32.mrb[0].mxu0
      %v277 = vadd.f32 0.0, %v276
      %v278 = vpop.f32.mrb[0].mxu0
      %279 = vdwg.mxu0
      %280 = vrot.lane.b32.xlu0 %v113, 120
      %v281 = vpop.permute.xlu0 %280
      %282 = vrot.lane.b32.xlu0 %v112, 88
      %v283 = vpop.permute.xlu0 %282
      %v284 = vsel %vm117, %v281, 0
      %v286 = vsel %vm117, %v283, 0
      %288 = vmatprep.subr.mxu0 0.0
      %289 = vmatpush1.xpose.msra.mxu0 %v286
      %290 = vmatprep.subr.mxu0 0.0
      %291 = vmatpush1.xpose.msra.mxu0 0.0
      %292 = vmatprep.subr.mxu0 0.0
      %293 = vmatpush1.xpose.msra.mxu0 0.0
      %294 = vmatprep.subr.mxu0 0.0
      %295 = vmatpush1.xpose.msra.mxu0 0.0
      %296 = vmatprep.subr.mxu0 0.0
      %297 = vmatpush1.xpose.msra.mxu0 0.0
      %298 = vmatprep.subr.mxu0 0.0
      %299 = vmatpush1.xpose.msra.mxu0 0.0
      %300 = vmatprep.subr.mxu0 0.0
      %301 = vmatpush1.xpose.msra.mxu0 0.0
      %302 = vmatprep.subr.mxu0 0.0
      %303 = vmatpush1.xpose.msra.mxu0 0.0
      %304 = vmatprep.subr.mxu0 0.0
      %305 = vmatpush1.xpose.msra.mxu0 0.0
      %306 = vmatprep.subr.mxu0 0.0
      %307 = vmatpush1.xpose.msra.mxu0 0.0
      %308 = vmatprep.subr.mxu0 0.0
      %309 = vmatpush1.xpose.msra.mxu0 0.0
      %310 = vmatprep.subr.mxu0 0.0
      %311 = vmatpush1.xpose.msra.mxu0 0.0
      %312 = vmatprep.subr.mxu0 0.0
      %313 = vmatpush1.xpose.msra.mxu0 0.0
      %314 = vmatprep.subr.mxu0 0.0
      %315 = vmatpush1.xpose.msra.mxu0 0.0
      %316 = vmatprep.subr.mxu0 0.0
      %317 = vmatpush1.xpose.msra.mxu0 0.0
      %318 = vmatprep.subr.mxu0 0.0
      %319 = vmatpush1.xpose.msra.mxu0 0.0
      %320 = vmatprep.subr.mxu0 0.0
      %321 = vmatpush1.xpose.msra.mxu0 0.0
      %322 = vmatprep.subr.mxu0 0.0
      %323 = vmatpush1.xpose.msra.mxu0 0.0
      %324 = vmatprep.subr.mxu0 0.0
      %325 = vmatpush1.xpose.msra.mxu0 0.0
      %326 = vmatprep.subr.mxu0 0.0
      %327 = vmatpush1.xpose.msra.mxu0 0.0
      %328 = vmatprep.subr.mxu0 0.0
      %329 = vmatpush1.xpose.msra.mxu0 0.0
      %330 = vmatprep.subr.mxu0 0.0
      %331 = vmatpush1.xpose.msra.mxu0 0.0
      %332 = vmatprep.subr.mxu0 0.0
      %333 = vmatpush1.xpose.msra.mxu0 0.0
      %334 = vmatprep.subr.mxu0 0.0
      %335 = vmatpush1.xpose.msra.mxu0 0.0
      %336 = vmatprep.subr.mxu0 0.0
      %337 = vmatpush1.xpose.msra.mxu0 0.0
      %338 = vmatprep.subr.mxu0 0.0
      %339 = vmatpush1.xpose.msra.mxu0 0.0
      %340 = vmatprep.subr.mxu0 0.0
      %341 = vmatpush1.xpose.msra.mxu0 0.0
      %342 = vmatprep.subr.mxu0 0.0
      %343 = vmatpush1.xpose.msra.mxu0 0.0
      %344 = vmatprep.subr.mxu0 0.0
      %345 = vmatpush1.xpose.msra.mxu0 0.0
      %346 = vmatprep.subr.mxu0 0.0
      %347 = vmatpush1.xpose.msra.mxu0 0.0
      %348 = vmatprep.subr.mxu0 0.0
      %349 = vmatpush1.xpose.msra.mxu0 0.0
      %350 = vmatprep.subr.mxu0 0.0
      %351 = vmatpush1.xpose.msra.mxu0 0.0
      %352 = vmatprep.mubr.f32.mxu0 0.0
      %353 = vmatmul.mubr.f32.gmra.mrb[0].mxu0 %v284
      %v354 = vpop.f32.mrb[0].mxu0
      %v355 = vadd.f32 0.0, %v354
      %v356 = vpop.f32.mrb[0].mxu0
      %357 = vdwg.mxu0
      %v358 = vsel %vm117, %v355, -inf
      %359 = vmax.xlane.f32.xlu0 %v358
      %v360 = vpop.xlane.xlu0 %359
      %v361 = vsub.f32 %v355, %v360
      %v362 = vmul.f32 %v361, 1.442695
      %v363 = vpow.pop %v362
      %v364 = vsel %vm117, %v363, 0.0
      %365 = vadd.xlane.f32.xlu0 %v364
      %v366 = vpop.xlane.xlu0 %365
      %v367 = vrcp.pop %v366
      %v368 = vmul.f32 %v363, %v367
      %369 = vrot.lane.b32.xlu0 %v112, 56
      %v370 = vpop.permute.xlu0 %369
      %v373 = vsel %vm117, %v368, 0
      %375 = vmatprep.subr.mxu0 0.0
      %376 = vmatpush1.msra.mxu0 %v370
      %377 = vmatprep.subr.mxu0 0.0
      %378 = vmatpush1.msra.mxu0 0.0
      %379 = vmatprep.subr.mxu0 0.0
      %380 = vmatpush1.msra.mxu0 0.0
      %381 = vmatprep.subr.mxu0 0.0
      %382 = vmatpush1.msra.mxu0 0.0
      %383 = vmatprep.subr.mxu0 0.0
      %384 = vmatpush1.msra.mxu0 0.0
      %385 = vmatprep.subr.mxu0 0.0
      %386 = vmatpush1.msra.mxu0 0.0
      %387 = vmatprep.subr.mxu0 0.0
      %388 = vmatpush1.msra.mxu0 0.0
      %389 = vmatprep.subr.mxu0 0.0
      %390 = vmatpush1.msra.mxu0 0.0
      %391 = vmatprep.subr.mxu0 0.0
      %392 = vmatpush1.msra.mxu0 0.0
      %393 = vmatprep.subr.mxu0 0.0
      %394 = vmatpush1.msra.mxu0 0.0
      %395 = vmatprep.subr.mxu0 0.0
      %396 = vmatpush1.msra.mxu0 0.0
      %397 = vmatprep.subr.mxu0 0.0
      %398 = vmatpush1.msra.mxu0 0.0
      %399 = vmatprep.subr.mxu0 0.0
      %400 = vmatpush1.msra.mxu0 0.0
      %401 = vmatprep.subr.mxu0 0.0
      %402 = vmatpush1.msra.mxu0 0.0
      %403 = vmatprep.subr.mxu0 0.0
      %404 = vmatpush1.msra.mxu0 0.0
      %405 = vmatprep.subr.mxu0 0.0
      %406 = vmatpush1.msra.mxu0 0.0
      %407 = vmatprep.subr.mxu0 0.0
      %408 = vmatpush1.msra.mxu0 0.0
      %409 = vmatprep.subr.mxu0 0.0
      %410 = vmatpush1.msra.mxu0 0.0
      %411 = vmatprep.subr.mxu0 0.0
      %412 = vmatpush1.msra.mxu0 0.0
      %413 = vmatprep.subr.mxu0 0.0
      %414 = vmatpush1.msra.mxu0 0.0
      %415 = vmatprep.subr.mxu0 0.0
      %416 = vmatpush1.msra.mxu0 0.0
      %417 = vmatprep.subr.mxu0 0.0
      %418 = vmatpush1.msra.mxu0 0.0
      %419 = vmatprep.subr.mxu0 0.0
      %420 = vmatpush1.msra.mxu0 0.0
      %421 = vmatprep.subr.mxu0 0.0
      %422 = vmatpush1.msra.mxu0 0.0
      %423 = vmatprep.subr.mxu0 0.0
      %424 = vmatpush1.msra.mxu0 0.0
      %425 = vmatprep.subr.mxu0 0.0
      %426 = vmatpush1.msra.mxu0 0.0
      %427 = vmatprep.subr.mxu0 0.0
      %428 = vmatpush1.msra.mxu0 0.0
      %429 = vmatprep.subr.mxu0 0.0
      %430 = vmatpush1.msra.mxu0 0.0
      %431 = vmatprep.subr.mxu0 0.0
      %432 = vmatpush1.msra.mxu0 0.0
      %433 = vmatprep.subr.mxu0 0.0
      %434 = vmatpush1.msra.mxu0 0.0
      %435 = vmatprep.subr.mxu0 0.0
      %436 = vmatpush1.msra.mxu0 0.0
      %437 = vmatprep.subr.mxu0 0.0
      %438 = vmatpush1.msra.mxu0 0.0
      %439 = vmatprep.mubr.f32.mxu0 0.0
      %440 = vmatmul.mubr.f32.gmra.mrb[0].mxu0 %v373
      %v441 = vpop.f32.mrb[0].mxu0
      %v442 = vadd.f32 0.0, %v441
      %v443 = vpop.f32.mrb[0].mxu0
      %444 = vdwg.mxu0
      %445 = vrot.lane.b32.xlu0 %v113, 112
      %v446 = vpop.permute.xlu0 %445
      %447 = vrot.lane.b32.xlu0 %v112, 80
      %v448 = vpop.permute.xlu0 %447
      %v449 = vsel %vm117, %v446, 0
      %v451 = vsel %vm117, %v448, 0
      %453 = vmatprep.subr.mxu0 0.0
      %454 = vmatpush1.xpose.msra.mxu0 %v451
      %455 = vmatprep.subr.mxu0 0.0
      %456 = vmatpush1.xpose.msra.mxu0 0.0
      %457 = vmatprep.subr.mxu0 0.0
      %458 = vmatpush1.xpose.msra.mxu0 0.0
      %459 = vmatprep.subr.mxu0 0.0
      %460 = vmatpush1.xpose.msra.mxu0 0.0
      %461 = vmatprep.subr.mxu0 0.0
      %462 = vmatpush1.xpose.msra.mxu0 0.0
      %463 = vmatprep.subr.mxu0 0.0
      %464 = vmatpush1.xpose.msra.mxu0 0.0
      %465 = vmatprep.subr.mxu0 0.0
      %466 = vmatpush1.xpose.msra.mxu0 0.0
      %467 = vmatprep.subr.mxu0 0.0
      %468 = vmatpush1.xpose.msra.mxu0 0.0
      %469 = vmatprep.subr.mxu0 0.0
      %470 = vmatpush1.xpose.msra.mxu0 0.0
      %471 = vmatprep.subr.mxu0 0.0
      %472 = vmatpush1.xpose.msra.mxu0 0.0
      %473 = vmatprep.subr.mxu0 0.0
      %474 = vmatpush1.xpose.msra.mxu0 0.0
      %475 = vmatprep.subr.mxu0 0.0
      %476 = vmatpush1.xpose.msra.mxu0 0.0
      %477 = vmatprep.subr.mxu0 0.0
      %478 = vmatpush1.xpose.msra.mxu0 0.0
      %479 = vmatprep.subr.mxu0 0.0
      %480 = vmatpush1.xpose.msra.mxu0 0.0
      %481 = vmatprep.subr.mxu0 0.0
      %482 = vmatpush1.xpose.msra.mxu0 0.0
      %483 = vmatprep.subr.mxu0 0.0
      %484 = vmatpush1.xpose.msra.mxu0 0.0
      %485 = vmatprep.subr.mxu0 0.0
      %486 = vmatpush1.xpose.msra.mxu0 0.0
      %487 = vmatprep.subr.mxu0 0.0
      %488 = vmatpush1.xpose.msra.mxu0 0.0
      %489 = vmatprep.subr.mxu0 0.0
      %490 = vmatpush1.xpose.msra.mxu0 0.0
      %491 = vmatprep.subr.mxu0 0.0
      %492 = vmatpush1.xpose.msra.mxu0 0.0
      %493 = vmatprep.subr.mxu0 0.0
      %494 = vmatpush1.xpose.msra.mxu0 0.0
      %495 = vmatprep.subr.mxu0 0.0
      %496 = vmatpush1.xpose.msra.mxu0 0.0
      %497 = vmatprep.subr.mxu0 0.0
      %498 = vmatpush1.xpose.msra.mxu0 0.0
      %499 = vmatprep.subr.mxu0 0.0
      %500 = vmatpush1.xpose.msra.mxu0 0.0
      %501 = vmatprep.subr.mxu0 0.0
      %502 = vmatpush1.xpose.msra.mxu0 0.0
      %503 = vmatprep.subr.mxu0 0.0
      %504 = vmatpush1.xpose.msra.mxu0 0.0
      %505 = vmatprep.subr.mxu0 0.0
      %506 = vmatpush1.xpose.msra.mxu0 0.0
      %507 = vmatprep.subr.mxu0 0.0
      %508 = vmatpush1.xpose.msra.mxu0 0.0
      %509 = vmatprep.subr.mxu0 0.0
      %510 = vmatpush1.xpose.msra.mxu0 0.0
      %511 = vmatprep.subr.mxu0 0.0
      %512 = vmatpush1.xpose.msra.mxu0 0.0
      %513 = vmatprep.subr.mxu0 0.0
      %514 = vmatpush1.xpose.msra.mxu0 0.0
      %515 = vmatprep.subr.mxu0 0.0
      %516 = vmatpush1.xpose.msra.mxu0 0.0
      %517 = vmatprep.mubr.f32.mxu0 0.0
      %518 = vmatmul.mubr.f32.gmra.mrb[0].mxu0 %v449
      %v519 = vpop.f32.mrb[0].mxu0
      %v520 = vadd.f32 0.0, %v519
      %v521 = vpop.f32.mrb[0].mxu0
      %522 = vdwg.mxu0
      %v523 = vsel %vm117, %v520, -inf
      %524 = vmax.xlane.f32.xlu0 %v523
      %v525 = vpop.xlane.xlu0 %524
      %v526 = vsub.f32 %v520, %v525
      %v527 = vmul.f32 %v526, 1.442695
      %v528 = vpow.pop %v527
      %v529 = vsel %vm117, %v528, 0.0
      %530 = vadd.xlane.f32.xlu0 %v529
      %v531 = vpop.xlane.xlu0 %530
      %v532 = vrcp.pop %v531
      %v533 = vmul.f32 %v528, %v532
      %534 = vrot.lane.b32.xlu0 %v112, 48
      %v535 = vpop.permute.xlu0 %534
      %v538 = vsel %vm117, %v533, 0
      %540 = vmatprep.subr.mxu0 0.0
      %541 = vmatpush1.msra.mxu0 %v535
      %542 = vmatprep.subr.mxu0 0.0
      %543 = vmatpush1.msra.mxu0 0.0
      %544 = vmatprep.subr.mxu0 0.0
      %545 = vmatpush1.msra.mxu0 0.0
      %546 = vmatprep.subr.mxu0 0.0
      %547 = vmatpush1.msra.mxu0 0.0
      %548 = vmatprep.subr.mxu0 0.0
      %549 = vmatpush1.msra.mxu0 0.0
      %550 = vmatprep.subr.mxu0 0.0
      %551 = vmatpush1.msra.mxu0 0.0
      %552 = vmatprep.subr.mxu0 0.0
      %553 = vmatpush1.msra.mxu0 0.0
      %554 = vmatprep.subr.mxu0 0.0
      %555 = vmatpush1.msra.mxu0 0.0
      %556 = vmatprep.subr.mxu0 0.0
      %557 = vmatpush1.msra.mxu0 0.0
      %558 = vmatprep.subr.mxu0 0.0
      %559 = vmatpush1.msra.mxu0 0.0
      %560 = vmatprep.subr.mxu0 0.0
      %561 = vmatpush1.msra.mxu0 0.0
      %562 = vmatprep.subr.mxu0 0.0
      %563 = vmatpush1.msra.mxu0 0.0
      %564 = vmatprep.subr.mxu0 0.0
      %565 = vmatpush1.msra.mxu0 0.0
      %566 = vmatprep.subr.mxu0 0.0
      %567 = vmatpush1.msra.mxu0 0.0
      %568 = vmatprep.subr.mxu0 0.0
      %569 = vmatpush1.msra.mxu0 0.0
      %570 = vmatprep.subr.mxu0 0.0
      %571 = vmatpush1.msra.mxu0 0.0
      %572 = vmatprep.subr.mxu0 0.0
      %573 = vmatpush1.msra.mxu0 0.0
      %574 = vmatprep.subr.mxu0 0.0
      %575 = vmatpush1.msra.mxu0 0.0
      %576 = vmatprep.subr.mxu0 0.0
      %577 = vmatpush1.msra.mxu0 0.0
      %578 = vmatprep.subr.mxu0 0.0
      %579 = vmatpush1.msra.mxu0 0.0
      %580 = vmatprep.subr.mxu0 0.0
      %581 = vmatpush1.msra.mxu0 0.0
      %582 = vmatprep.subr.mxu0 0.0
      %583 = vmatpush1.msra.mxu0 0.0
      %584 = vmatprep.subr.mxu0 0.0
      %585 = vmatpush1.msra.mxu0 0.0
      %586 = vmatprep.subr.mxu0 0.0
      %587 = vmatpush1.msra.mxu0 0.0
      %588 = vmatprep.subr.mxu0 0.0
      %589 = vmatpush1.msra.mxu0 0.0
      %590 = vmatprep.subr.mxu0 0.0
      %591 = vmatpush1.msra.mxu0 0.0
      %592 = vmatprep.subr.mxu0 0.0
      %593 = vmatpush1.msra.mxu0 0.0
      %594 = vmatprep.subr.mxu0 0.0
      %595 = vmatpush1.msra.mxu0 0.0
      %596 = vmatprep.subr.mxu0 0.0
      %597 = vmatpush1.msra.mxu0 0.0
      %598 = vmatprep.subr.mxu0 0.0
      %599 = vmatpush1.msra.mxu0 0.0
      %600 = vmatprep.subr.mxu0 0.0
      %601 = vmatpush1.msra.mxu0 0.0
      %602 = vmatprep.subr.mxu0 0.0
      %603 = vmatpush1.msra.mxu0 0.0
      %604 = vmatprep.mubr.f32.mxu0 0.0
      %605 = vmatmul.mubr.f32.gmra.mrb[0].mxu0 %v538
      %v606 = vpop.f32.mrb[0].mxu0
      %v607 = vadd.f32 0.0, %v606
      %v608 = vpop.f32.mrb[0].mxu0
      %609 = vdwg.mxu0
      %610 = vrot.lane.b32.xlu0 %v113, 104
      %v611 = vpop.permute.xlu0 %610
      %612 = vrot.lane.b32.xlu0 %v112, 72
      %v613 = vpop.permute.xlu0 %612
      %v614 = vsel %vm117, %v611, 0
      %v616 = vsel %vm117, %v613, 0
      %618 = vmatprep.subr.mxu0 0.0
      %619 = vmatpush1.xpose.msra.mxu0 %v616
      %620 = vmatprep.subr.mxu0 0.0
      %621 = vmatpush1.xpose.msra.mxu0 0.0
      %622 = vmatprep.subr.mxu0 0.0
      %623 = vmatpush1.xpose.msra.mxu0 0.0
      %624 = vmatprep.subr.mxu0 0.0
      %625 = vmatpush1.xpose.msra.mxu0 0.0
      %626 = vmatprep.subr.mxu0 0.0
      %627 = vmatpush1.xpose.msra.mxu0 0.0
      %628 = vmatprep.subr.mxu0 0.0
      %629 = vmatpush1.xpose.msra.mxu0 0.0
      %630 = vmatprep.subr.mxu0 0.0
      %631 = vmatpush1.xpose.msra.mxu0 0.0
      %632 = vmatprep.subr.mxu0 0.0
      %633 = vmatpush1.xpose.msra.mxu0 0.0
      %634 = vmatprep.subr.mxu0 0.0
      %635 = vmatpush1.xpose.msra.mxu0 0.0
      %636 = vmatprep.subr.mxu0 0.0
      %637 = vmatpush1.xpose.msra.mxu0 0.0
      %638 = vmatprep.subr.mxu0 0.0
      %639 = vmatpush1.xpose.msra.mxu0 0.0
      %640 = vmatprep.subr.mxu0 0.0
      %641 = vmatpush1.xpose.msra.mxu0 0.0
      %642 = vmatprep.subr.mxu0 0.0
      %643 = vmatpush1.xpose.msra.mxu0 0.0
      %644 = vmatprep.subr.mxu0 0.0
      %645 = vmatpush1.xpose.msra.mxu0 0.0
      %646 = vmatprep.subr.mxu0 0.0
      %647 = vmatpush1.xpose.msra.mxu0 0.0
      %648 = vmatprep.subr.mxu0 0.0
      %649 = vmatpush1.xpose.msra.mxu0 0.0
      %650 = vmatprep.subr.mxu0 0.0
      %651 = vmatpush1.xpose.msra.mxu0 0.0
      %652 = vmatprep.subr.mxu0 0.0
      %653 = vmatpush1.xpose.msra.mxu0 0.0
      %654 = vmatprep.subr.mxu0 0.0
      %655 = vmatpush1.xpose.msra.mxu0 0.0
      %656 = vmatprep.subr.mxu0 0.0
      %657 = vmatpush1.xpose.msra.mxu0 0.0
      %658 = vmatprep.subr.mxu0 0.0
      %659 = vmatpush1.xpose.msra.mxu0 0.0
      %660 = vmatprep.subr.mxu0 0.0
      %661 = vmatpush1.xpose.msra.mxu0 0.0
      %662 = vmatprep.subr.mxu0 0.0
      %663 = vmatpush1.xpose.msra.mxu0 0.0
      %664 = vmatprep.subr.mxu0 0.0
      %665 = vmatpush1.xpose.msra.mxu0 0.0
      %666 = vmatprep.subr.mxu0 0.0
      %667 = vmatpush1.xpose.msra.mxu0 0.0
      %668 = vmatprep.subr.mxu0 0.0
      %669 = vmatpush1.xpose.msra.mxu0 0.0
      %670 = vmatprep.subr.mxu0 0.0
      %671 = vmatpush1.xpose.msra.mxu0 0.0
      %672 = vmatprep.subr.mxu0 0.0
      %673 = vmatpush1.xpose.msra.mxu0 0.0
      %674 = vmatprep.subr.mxu0 0.0
      %675 = vmatpush1.xpose.msra.mxu0 0.0
      %676 = vmatprep.subr.mxu0 0.0
      %677 = vmatpush1.xpose.msra.mxu0 0.0
      %678 = vmatprep.subr.mxu0 0.0
      %679 = vmatpush1.xpose.msra.mxu0 0.0
      %680 = vmatprep.subr.mxu0 0.0
      %681 = vmatpush1.xpose.msra.mxu0 0.0
      %682 = vmatprep.mubr.f32.mxu0 0.0
      %683 = vmatmul.mubr.f32.gmra.mrb[0].mxu0 %v614
      %v684 = vpop.f32.mrb[0].mxu0
      %v685 = vadd.f32 0.0, %v684
      %v686 = vpop.f32.mrb[0].mxu0
      %687 = vdwg.mxu0
      %v688 = vsel %vm117, %v685, -inf
      %689 = vmax.xlane.f32.xlu0 %v688
      %v690 = vpop.xlane.xlu0 %689
      %v691 = vsub.f32 %v685, %v690
      %v692 = vmul.f32 %v691, 1.442695
      %v693 = vpow.pop %v692
      %v694 = vsel %vm117, %v693, 0.0
      %695 = vadd.xlane.f32.xlu0 %v694
      %v696 = vpop.xlane.xlu0 %695
      %v697 = vrcp.pop %v696
      %v698 = vmul.f32 %v693, %v697
      %699 = vrot.lane.b32.xlu0 %v112, 40
      %v700 = vpop.permute.xlu0 %699
      %v703 = vsel %vm117, %v698, 0
      %705 = vmatprep.subr.mxu0 0.0
      %706 = vmatpush1.msra.mxu0 %v700
      %707 = vmatprep.subr.mxu0 0.0
      %708 = vmatpush1.msra.mxu0 0.0
      %709 = vmatprep.subr.mxu0 0.0
      %710 = vmatpush1.msra.mxu0 0.0
      %711 = vmatprep.subr.mxu0 0.0
      %712 = vmatpush1.msra.mxu0 0.0
      %713 = vmatprep.subr.mxu0 0.0
      %714 = vmatpush1.msra.mxu0 0.0
      %715 = vmatprep.subr.mxu0 0.0
      %716 = vmatpush1.msra.mxu0 0.0
      %717 = vmatprep.subr.mxu0 0.0
      %718 = vmatpush1.msra.mxu0 0.0
      %719 = vmatprep.subr.mxu0 0.0
      %720 = vmatpush1.msra.mxu0 0.0
      %721 = vmatprep.subr.mxu0 0.0
      %722 = vmatpush1.msra.mxu0 0.0
      %723 = vmatprep.subr.mxu0 0.0
      %724 = vmatpush1.msra.mxu0 0.0
      %725 = vmatprep.subr.mxu0 0.0
      %726 = vmatpush1.msra.mxu0 0.0
      %727 = vmatprep.subr.mxu0 0.0
      %728 = vmatpush1.msra.mxu0 0.0
      %729 = vmatprep.subr.mxu0 0.0
      %730 = vmatpush1.msra.mxu0 0.0
      %731 = vmatprep.subr.mxu0 0.0
      %732 = vmatpush1.msra.mxu0 0.0
      %733 = vmatprep.subr.mxu0 0.0
      %734 = vmatpush1.msra.mxu0 0.0
      %735 = vmatprep.subr.mxu0 0.0
      %736 = vmatpush1.msra.mxu0 0.0
      %737 = vmatprep.subr.mxu0 0.0
      %738 = vmatpush1.msra.mxu0 0.0
      %739 = vmatprep.subr.mxu0 0.0
      %740 = vmatpush1.msra.mxu0 0.0
      %741 = vmatprep.subr.mxu0 0.0
      %742 = vmatpush1.msra.mxu0 0.0
      %743 = vmatprep.subr.mxu0 0.0
      %744 = vmatpush1.msra.mxu0 0.0
      %745 = vmatprep.subr.mxu0 0.0
      %746 = vmatpush1.msra.mxu0 0.0
      %747 = vmatprep.subr.mxu0 0.0
      %748 = vmatpush1.msra.mxu0 0.0
      %749 = vmatprep.subr.mxu0 0.0
      %750 = vmatpush1.msra.mxu0 0.0
      %751 = vmatprep.subr.mxu0 0.0
      %752 = vmatpush1.msra.mxu0 0.0
      %753 = vmatprep.subr.mxu0 0.0
      %754 = vmatpush1.msra.mxu0 0.0
      %755 = vmatprep.subr.mxu0 0.0
      %756 = vmatpush1.msra.mxu0 0.0
      %757 = vmatprep.subr.mxu0 0.0
      %758 = vmatpush1.msra.mxu0 0.0
      %759 = vmatprep.subr.mxu0 0.0
      %760 = vmatpush1.msra.mxu0 0.0
      %761 = vmatprep.subr.mxu0 0.0
      %762 = vmatpush1.msra.mxu0 0.0
      %763 = vmatprep.subr.mxu0 0.0
      %764 = vmatpush1.msra.mxu0 0.0
      %765 = vmatprep.subr.mxu0 0.0
      %766 = vmatpush1.msra.mxu0 0.0
      %767 = vmatprep.subr.mxu0 0.0
      %768 = vmatpush1.msra.mxu0 0.0
      %769 = vmatprep.mubr.f32.mxu0 0.0
      %770 = vmatmul.mubr.f32.gmra.mrb[0].mxu0 %v703
      %v771 = vpop.f32.mrb[0].mxu0
      %v772 = vadd.f32 0.0, %v771
      %v773 = vpop.f32.mrb[0].mxu0
      %774 = vdwg.mxu0
      %776 = vrot.lane.b32.xlu0 %v442, 8
      %v777 = vpop.permute.xlu0 %776
      %780 = vrot.lane.b32.xlu0 %v607, 16
      %v781 = vpop.permute.xlu0 %780
      %784 = vrot.lane.b32.xlu0 %v772, 24
      %v785 = vpop.permute.xlu0 %784
      %v787 = vsel %vm117, %v277, %v777
      %vm788 = vcmask 130048
      %v789 = vsel %vm788, %v787, %v781
      %vm790 = vcmask 195584
      %v791 = vsel %vm790, %v789, %v785
      %vm792 = vcmask 261120
      %793 = vst.msk [vmem:[%s111] sm:$0xff] %vm792, %v791
      %p794 = scmp.lt.s32.totalorder %s12, 1
      %s795 = scalar_select %p794, %s12, 1
      %s796 = smul.addr %s795, 8
      %s797 = scalar_lea.vmem %s1, %s796
      // Predicated region
      $region25: #{transformer_forward.9} parent=23 // pred_check
        %p798 = pneg %p56
      $region26: #{transformer_forward.9} parent=23 // pred_check_branch
        %800 = sbr.rel (%p798) target = $region28
      $region27: #{transformer_forward.9} parent=23 // pred_region
        _
      $region28: #{transformer_forward.9} parent=23 // pred_fallthru
        _
    $region24: #{transformer_forward.9} parent=5 // pred_fallthru
      _
    %p801 = scmp.le.s32.totalorder 2, %s7
    // Predicated region
    $region29: #{transformer_forward.9} parent=5 // pred_check
      %p802 = pneg %p801
    $region30: #{transformer_forward.9} parent=5 // pred_check_branch
      %804 = sbr.rel (%p802) target = $region32
    $region31: #{transformer_forward.9} parent=5 // pred_region
      %s805 = ssub.s32 %s7, 2
      // Predicated region
      $region33: #{transformer_forward.9} parent=31 // pred_check
        %p806 = pneg %p62
      $region34: #{transformer_forward.9} parent=31 // pred_check_branch
        %808 = sbr.rel (%p806) target = $region36
      $region35: #{transformer_forward.9} parent=31 // pred_region
        %p809 = scmp.lt.s32.totalorder %s13, 1
        %s810 = scalar_select %p809, %s13, 1
        %s811 = smul.addr %s810, 8
        %s812 = scalar_lea.vmem %s1, %s811
      $region36: #{transformer_forward.9} parent=31 // pred_fallthru
        _
    $region32: #{transformer_forward.9} parent=5 // pred_fallthru
      _
  $region6: #{transformer_forward.9} parent=0 // loop_footer
    %s11 = sadd.s32 1, %s7
  $region7: #{transformer_forward.9} parent=0 // loop_footer_branch
    %6 = sbr.rel target = $region3
  $region8: #{transformer_forward.9} parent=0 // loop_exit
    _

// kernel: transformer_forward.11
$region0: #{transformer_forward.11}
  #allocation0 [shape = 'u32[]', space=smem, size = 0x4, offset = 0x4, fixed_abs, tag = 'smem constant byte address 0x4 - core index']
  #allocation1 [shape = 'u32[144,128]{1,0:T(1,128)}', space=vmem, size = 0x12000, scoped, tag = 'internal scratch']
  #allocation2 [shape = 'f32[8,32]{1,0:T(8,128)}', space=vmem, size = 0x1000, scoped, tag = 'scratch operand']
  #allocation3 [shape = 'f32[8,32]{1,0:T(8,128)}', space=vmem, size = 0x1000, scoped, tag = 'scratch operand']
  %s0 = inlined_call_operand.vmem [shape: f32[16,32], index: 0, kind: input, shape index: {}, may-alias: {0,7}]
  %s1 = inlined_call_operand.vmem [shape: f32[1,32], index: 1, kind: input, shape index: {}]
  %s2 = inlined_call_operand.vmem [shape: f32[1,32], index: 2, kind: input, shape index: {}]
  %s3 = inlined_call_operand.vmem [shape: f32[32,64], index: 3, kind: input, shape index: {}]
  %s4 = inlined_call_operand.vmem [shape: f32[1,64], index: 4, kind: input, shape index: {}]
  %s5 = inlined_call_operand.vmem [shape: f32[64,32], index: 5, kind: input, shape index: {}]
  %s6 = inlined_call_operand.vmem [shape: f32[1,32], index: 6, kind: input, shape index: {}]
  %s7 = inlined_call_operand.vmem [shape: f32[16,32], index: 7, kind: output, shape index: {}, may-alias: {0,7}]
  %s8 = sld [smem:[#allocation0]]
  $region69: #{transformer_forward.11} parent=0
    _
  %s10 = ssub.s32 1, %s8
  %s11 = scalar_select 0, %s10, %s8
  loop: start=0, step=1, limit=4
  $region2: #{transformer_forward.11} parent=0 // loop_pre_header
    _
  $region3: #{transformer_forward.11} parent=0 // loop_header
    %s13 = sphi 0, %s17
    %p14 = scmp.ge.s32.totalorder %s13, 4
    %s20 = sphi 0, %s32
    %s21 = sphi 0, %s28
    %s22 = sphi 0, %s20
    %s23 = sphi 0, %s21
    %s24 = sphi 0, %s22
    %s25 = sphi 0, %s23
    %s35 = sphi 0, %s37
    %s38 = sphi 0, %s35
    %s39 = sphi 0, %s38
    %s55 = sphi 0, %s39
    %s59 = sphi 0, %s59
    %s61 = sphi 0, %s59
    %s62 = sphi 0, %s61
    %s76 = sphi 0, %s62
    %s80 = sphi 0, %s80
    %s82 = sphi 0, %s80
    %s83 = sphi 0, %s82
    %s97 = sphi 0, %s83
    %s103 = sphi 0, %s105
    %s106 = sphi 0, %s103
    %s107 = sphi 0, %s106
    %s123 = sphi 0, %s107
    %s129 = sphi 0, %s131
    %s132 = sphi 0, %s129
    %s133 = sphi 0, %s132
    %s149 = sphi 0, %s133
    %s155 = sphi 0, %s157
    %s158 = sphi 0, %s155
    %s159 = sphi 0, %s158
    %s175 = sphi 0, %s159
    %s179 = sphi 0, %s179
    %s181 = sphi 0, %s179
    %s182 = sphi 0, %s181
    %s196 = sphi 0, %s182
    %s202 = sphi 0, %s204
    %s205 = sphi 0, %s202
    %s206 = sphi 0, %s205
    %s222 = sphi 0, %s206
  $region4: #{transformer_forward.11} parent=0 // loop_header_branch
    %16 = sbr.rel (%p14) target = $region8
  $region5: #{transformer_forward.11} parent=0 // loop_body
    %s18 = ssub.s32 %s13, 1
    %s19 = ssub.s32 %s13, 2
    %s26 = sadd.s32 1, %s21
    %p27 = scmp.ge.s32.totalorder %s26, 1
    %s28 = scalar_select %p27, 0, %s26
    %s29 = sadd.s32 1, %s20
    %s30 = scalar_select %p27, %s29, %s20
    %p31 = scmp.ge.s32.totalorder %s30, 2
    %s32 = scalar_select %p31, 0, %s30
    %s33 = ssub.s32 %s20, %s32
    %p34 = scmp.eq.s32.totalorder %s33, 0
    %s36 = sadd.s32 %s35, 1
    %s37 = scalar_select %p34, %s35, %s36
    %p40 = pneg %p34
    %p41 = scmp.eq.s32.totalorder %s13, 1
    %p42 = por %p40, %p41
    %p43 = scmp.ne.s32.totalorder %s35, %s38
    %p44 = scmp.eq.s32.totalorder %s13, 0
    %p45 = por %p43, %p44
    %p46 = scmp.ne.s32.totalorder %s35, %s38
    %p47 = scmp.eq.s32.totalorder %s18, 1
    %p48 = por %p46, %p47
    %p49 = scmp.ne.s32.totalorder %s38, %s39
    %p50 = scmp.eq.s32.totalorder %s18, 0
    %p51 = por %p49, %p50
    %p52 = scmp.ne.s32.totalorder %s38, %s39
    %p53 = scmp.eq.s32.totalorder %s19, 1
    %p54 = por %p52, %p53
    %p56 = scmp.ne.s32.totalorder %s39, %s55
    %p57 = scmp.eq.s32.totalorder %s19, 0
    %p58 = por %p56, %p57
    %s60 = sadd.s32 %s59, 1
    %p63 = scmp.eq.s32.totalorder %s13, 1
    %p64 = scmp.ne.s32.totalorder %s59, %s61
    %p65 = scmp.eq.s32.totalorder %s13, 0
    %p66 = por %p64, %p65
    %p67 = scmp.ne.s32.totalorder %s59, %s61
    %p68 = scmp.eq.s32.totalorder %s18, 1
    %p69 = por %p67, %p68
    %p70 = scmp.ne.s32.totalorder %s61, %s62
    %p71 = scmp.eq.s32.totalorder %s18, 0
    %p72 = por %p70, %p71
    %p73 = scmp.ne.s32.totalorder %s61, %s62
    %p74 = scmp.eq.s32.totalorder %s19, 1
    %p75 = por %p73, %p74
    %p77 = scmp.ne.s32.totalorder %s62, %s76
    %p78 = scmp.eq.s32.totalorder %s19, 0
    %p79 = por %p77, %p78
    %s81 = sadd.s32 %s80, 1
    %p84 = scmp.eq.s32.totalorder %s13, 1
    %p85 = scmp.ne.s32.totalorder %s80, %s82
    %p86 = scmp.eq.s32.totalorder %s13, 0
    %p87 = por %p85, %p86
    %p88 = scmp.ne.s32.totalorder %s80, %s82
    %p89 = scmp.eq.s32.totalorder %s18, 1
    %p90 = por %p88, %p89
    %p91 = scmp.ne.s32.totalorder %s82, %s83
    %p92 = scmp.eq.s32.totalorder %s18, 0
    %p93 = por %p91, %p92
    %p94 = scmp.ne.s32.totalorder %s82, %s83
    %p95 = scmp.eq.s32.totalorder %s19, 1
    %p96 = por %p94, %p95
    %p98 = scmp.ne.s32.totalorder %s83, %s97
    %p99 = scmp.eq.s32.totalorder %s19, 0
    %p100 = por %p98, %p99
    %s101 = ssub.s32 %s21, %s28
    %p102 = scmp.eq.s32.totalorder %s101, 0
    %s104 = sadd.s32 %s103, 1
    %s105 = scalar_select %p102, %s103, %s104
    %p108 = pneg %p102
    %p109 = scmp.eq.s32.totalorder %s13, 1
    %p110 = por %p108, %p109
    %p111 = scmp.ne.s32.totalorder %s103, %s106
    %p112 = scmp.eq.s32.totalorder %s13, 0
    %p113 = por %p111, %p112
    %p114 = scmp.ne.s32.totalorder %s103, %s106
    %p115 = scmp.eq.s32.totalorder %s18, 1
    %p116 = por %p114, %p115
    %p117 = scmp.ne.s32.totalorder %s106, %s107
    %p118 = scmp.eq.s32.totalorder %s18, 0
    %p119 = por %p117, %p118
    %p120 = scmp.ne.s32.totalorder %s106, %s107
    %p121 = scmp.eq.s32.totalorder %s19, 1
    %p122 = por %p120, %p121
    %p124 = scmp.ne.s32.totalorder %s107, %s123
    %p125 = scmp.eq.s32.totalorder %s19, 0
    %p126 = por %p124, %p125
    %s127 = ssub.s32 %s21, %s28
    %p128 = scmp.eq.s32.totalorder %s127, 0
    %s130 = sadd.s32 %s129, 1
    %s131 = scalar_select %p128, %s129, %s130
    %p134 = pneg %p128
    %p135 = scmp.eq.s32.totalorder %s13, 1
    %p136 = por %p134, %p135
    %p137 = scmp.ne.s32.totalorder %s129, %s132
    %p138 = scmp.eq.s32.totalorder %s13, 0
    %p139 = por %p137, %p138
    %p140 = scmp.ne.s32.totalorder %s129, %s132
    %p141 = scmp.eq.s32.totalorder %s18, 1
    %p142 = por %p140, %p141
    %p143 = scmp.ne.s32.totalorder %s132, %s133
    %p144 = scmp.eq.s32.totalorder %s18, 0
    %p145 = por %p143, %p144
    %p146 = scmp.ne.s32.totalorder %s132, %s133
    %p147 = scmp.eq.s32.totalorder %s19, 1
    %p148 = por %p146, %p147
    %p150 = scmp.ne.s32.totalorder %s133, %s149
    %p151 = scmp.eq.s32.totalorder %s19, 0
    %p152 = por %p150, %p151
    %s153 = ssub.s32 %s21, %s28
    %p154 = scmp.eq.s32.totalorder %s153, 0
    %s156 = sadd.s32 %s155, 1
    %s157 = scalar_select %p154, %s155, %s156
    %p160 = pneg %p154
    %p161 = scmp.eq.s32.totalorder %s13, 1
    %p162 = por %p160, %p161
    %p163 = scmp.ne.s32.totalorder %s155, %s158
    %p164 = scmp.eq.s32.totalorder %s13, 0
    %p165 = por %p163, %p164
    %p166 = scmp.ne.s32.totalorder %s155, %s158
    %p167 = scmp.eq.s32.totalorder %s18, 1
    %p168 = por %p166, %p167
    %p169 = scmp.ne.s32.totalorder %s158, %s159
    %p170 = scmp.eq.s32.totalorder %s18, 0
    %p171 = por %p169, %p170
    %p172 = scmp.ne.s32.totalorder %s158, %s159
    %p173 = scmp.eq.s32.totalorder %s19, 1
    %p174 = por %p172, %p173
    %p176 = scmp.ne.s32.totalorder %s159, %s175
    %p177 = scmp.eq.s32.totalorder %s19, 0
    %p178 = por %p176, %p177
    %s180 = sadd.s32 %s179, 1
    %p183 = scmp.eq.s32.totalorder %s13, 1
    %p184 = scmp.ne.s32.totalorder %s179, %s181
    %p185 = scmp.eq.s32.totalorder %s13, 0
    %p186 = por %p184, %p185
    %p187 = scmp.ne.s32.totalorder %s179, %s181
    %p188 = scmp.eq.s32.totalorder %s18, 1
    %p189 = por %p187, %p188
    %p190 = scmp.ne.s32.totalorder %s181, %s182
    %p191 = scmp.eq.s32.totalorder %s18, 0
    %p192 = por %p190, %p191
    %p193 = scmp.ne.s32.totalorder %s181, %s182
    %p194 = scmp.eq.s32.totalorder %s19, 1
    %p195 = por %p193, %p194
    %p197 = scmp.ne.s32.totalorder %s182, %s196
    %p198 = scmp.eq.s32.totalorder %s19, 0
    %p199 = por %p197, %p198
    %s200 = ssub.s32 %s20, %s32
    %p201 = scmp.eq.s32.totalorder %s200, 0
    %s203 = sadd.s32 %s202, 1
    %s204 = scalar_select %p201, %s202, %s203
    %p207 = pneg %p201
    %p208 = scmp.eq.s32.totalorder %s13, 1
    %p209 = por %p207, %p208
    %p210 = scmp.ne.s32.totalorder %s202, %s205
    %p211 = scmp.eq.s32.totalorder %s13, 0
    %p212 = por %p210, %p211
    %p213 = scmp.ne.s32.totalorder %s202, %s205
    %p214 = scmp.eq.s32.totalorder %s18, 1
    %p215 = por %p213, %p214
    %p216 = scmp.ne.s32.totalorder %s205, %s206
    %p217 = scmp.eq.s32.totalorder %s18, 0
    %p218 = por %p216, %p217
    %p219 = scmp.ne.s32.totalorder %s205, %s206
    %p220 = scmp.eq.s32.totalorder %s19, 1
    %p221 = por %p219, %p220
    %p223 = scmp.ne.s32.totalorder %s206, %s222
    %p224 = scmp.eq.s32.totalorder %s19, 0
    %p225 = por %p223, %p224
    %p226 = scmp.le.s32.totalorder 1, %s13
    %p227 = scmp.lt.s32.totalorder %s13, 3
    %p228 = pnand %p226, %p227
    %p229 = pneg %p228
    // Predicated region
    $region9: #{transformer_forward.11} parent=5 // pred_check
      _
    $region10: #{transformer_forward.11} parent=5 // pred_check_branch
      %231 = sbr.rel (%p228) target = $region12
    $region11: #{transformer_forward.11} parent=5 // pred_region
      %s232 = ssub.s32 %s13, 1
      // Predicated region
      $region13: #{transformer_forward.11} parent=11 // pred_check
        %p233 = pneg %p72
      $region14: #{transformer_forward.11} parent=11 // pred_check_branch
        %235 = sbr.rel (%p233) target = $region16
      $region15: #{transformer_forward.11} parent=11 // pred_region
        _
      $region16: #{transformer_forward.11} parent=11 // pred_fallthru
        _
      // Predicated region
      $region17: #{transformer_forward.11} parent=11 // pred_check
        %p236 = pneg %p93
      $region18: #{transformer_forward.11} parent=11 // pred_check_branch
        %238 = sbr.rel (%p236) target = $region20
      $region19: #{transformer_forward.11} parent=11 // pred_region
        _
      $region20: #{transformer_forward.11} parent=11 // pred_fallthru
        _
      // Predicated region
      $region21: #{transformer_forward.11} parent=11 // pred_check
        %p239 = pneg %p119
      $region22: #{transformer_forward.11} parent=11 // pred_check_branch
        %241 = sbr.rel (%p239) target = $region24
      $region23: #{transformer_forward.11} parent=11 // pred_region
        %p242 = scmp.lt.s32.totalorder %s23, 0
        %s243 = scalar_select %p242, %s23, 0
        %s244 = smul.addr %s243, 8
        %s245 = scalar_lea.vmem %s3, %s244
      $region24: #{transformer_forward.11} parent=11 // pred_fallthru
        _
      // Predicated region
      $region25: #{transformer_forward.11} parent=11 // pred_check
        %p246 = pneg %p145
      $region26: #{transformer_forward.11} parent=11 // pred_check_branch
        %248 = sbr.rel (%p246) target = $region28
      $region27: #{transformer_forward.11} parent=11 // pred_region
        %p249 = scmp.lt.s32.totalorder %s23, 0
        %s250 = scalar_select %p249, %s23, 0
        %s251 = scalar_lea.vmem %s4, %s250
      $region28: #{transformer_forward.11} parent=11 // pred_fallthru
        _
      // Predicated region
      $region29: #{transformer_forward.11} parent=11 // pred_check
        %p252 = pneg %p171
      $region30: #{transformer_forward.11} parent=11 // pred_check_branch
        %254 = sbr.rel (%p252) target = $region32
      $region31: #{transformer_forward.11} parent=11 // pred_region
        %s255 = smul.u32 8, %s23
        %p256 = scmp.lt.s32.totalorder %s255, 7
        %s257 = scalar_select %p256, %s255, 7
        %s258 = smul.addr %s257, 8
        %s259 = scalar_lea.vmem %s5, %s258
        %s260 = smul.u32 8, %s23
      $region32: #{transformer_forward.11} parent=11 // pred_fallthru
        _
      // Predicated region
      $region33: #{transformer_forward.11} parent=11 // pred_check
        %p261 = pneg %p192
      $region34: #{transformer_forward.11} parent=11 // pred_check_branch
        %263 = sbr.rel (%p261) target = $region36
      $region35: #{transformer_forward.11} parent=11 // pred_region
        _
      $region36: #{transformer_forward.11} parent=11 // pred_fallthru
        _
    $region12: #{transformer_forward.11} parent=5 // pred_fallthru
      _
    %p264 = scmp.lt.s32.totalorder %s13, 2
    // Predicated region
    $region37: #{transformer_forward.11} parent=5 // pred_check
      %p265 = pneg %p264
    $region38: #{transformer_forward.11} parent=5 // pred_check_branch
      %267 = sbr.rel (%p265) target = $region40
    $region39: #{transformer_forward.11} parent=5 // pred_region
      // Predicated region
      $region41: #{transformer_forward.11} parent=39 // pred_check
        %p268 = pneg %p45
      $region42: #{transformer_forward.11} parent=39 // pred_check_branch
        %270 = sbr.rel (%p268) target = $region44
      $region43: #{transformer_forward.11} parent=39 // pred_region
        %p271 = scmp.lt.s32.totalorder %s20, 1
        %s272 = scalar_select %p271, %s20, 1
        %s273 = smul.addr %s272, 8
        %s274 = scalar_lea.vmem %s0, %s273
      $region44: #{transformer_forward.11} parent=39 // pred_fallthru
        _
    $region40: #{transformer_forward.11} parent=5 // pred_fallthru
      _
    %p275 = scmp.le.s32.totalorder 1, %s13
    %p276 = scmp.lt.s32.totalorder %s13, 3
    %p277 = pnand %p275, %p276
    %p278 = pneg %p277
    // Predicated region
    $region45: #{transformer_forward.11} parent=5 // pred_check
      _
    $region46: #{transformer_forward.11} parent=5 // pred_check_branch
      %280 = sbr.rel (%p277) target = $region48
    $region47: #{transformer_forward.11} parent=5 // pred_region
      %s281 = ssub.s32 %s13, 1
      %p282 = scmp.lt.s32.totalorder %s22, 1
      %s283 = scalar_select %p282, %s22, 1
      %s284 = smul.addr %s283, 8
      %s285 = scalar_lea.vmem %s0, %s284
      %p286 = pneg %p51
      %p287 = pneg %p48
      %p288 = pneg %p72
      %p289 = pneg %p69
      %p290 = pneg %p93
      %p291 = pneg %p90
      %p292 = scmp.lt.s32.totalorder %s23, 0
      %s293 = scalar_select %p292, %s23, 0
      %s294 = smul.addr %s293, 8
      %s295 = scalar_lea.vmem %s3, %s294
      %p296 = pneg %p119
      %p297 = pneg %p116
      %p298 = scmp.lt.s32.totalorder %s23, 0
      %s299 = scalar_select %p298, %s23, 0
      %s300 = scalar_lea.vmem %s4, %s299
      %p301 = pneg %p145
      %p302 = pneg %p142
      %s303 = smul.u32 8, %s23
      %p304 = scmp.lt.s32.totalorder %s303, 7
      %s305 = scalar_select %p304, %s303, 7
      %s306 = smul.addr %s305, 8
      %s307 = scalar_lea.vmem %s5, %s306
      %p308 = pneg %p171
      %p309 = pneg %p168
      %p310 = pneg %p192
      %p311 = pneg %p189
      %p312 = pneg %p218
      %p313 = pneg %p215
      %p314 = scmp.lt.s32.totalorder %s22, 1
      %s315 = scalar_select %p314, %s22, 1
      %s316 = smul.addr %s315, 8
      %s317 = scalar_lea.vmem %s7, %s316
      %p318 = scmp.lt.s32.totalorder %s22, 1
      %s319 = scalar_select %p318, %s22, 1
      %s320 = smul.addr %s319, 8
      %s321 = scalar_lea.vmem %s0, %s320
      %p322 = scmp.lt.s32.totalorder %s23, 0
      %s323 = scalar_select %p322, %s23, 0
      %s324 = smul.addr %s323, 8
      %s325 = scalar_lea.vmem %s3, %s324
      %p326 = scmp.lt.s32.totalorder %s23, 0
      %s327 = scalar_select %p326, %s23, 0
      %s328 = scalar_lea.vmem %s4, %s327
      %s329 = smul.u32 8, %s23
      %p330 = scmp.lt.s32.totalorder %s329, 7
      %s331 = scalar_select %p330, %s329, 7
      %s332 = smul.addr %s331, 8
      %s333 = scalar_lea.vmem %s5, %s332
      %s334 = smul.u32 8, %s23
      %p335 = scmp.lt.s32.totalorder %s22, 1
      %s336 = scalar_select %p335, %s22, 1
      %s337 = smul.addr %s336, 8
      %s338 = scalar_lea.vmem %s7, %s337
      %p339 = scmp.eq.s32.totalorder %s23, 0
      // Predicated region
      $region49: #{transformer_forward.11} parent=47 // pred_check
        %p340 = pneg %p339
      $region50: #{transformer_forward.11} parent=47 // pred_check_branch
        %342 = sbr.rel (%p340) target = $region52
      $region51: #{transformer_forward.11} parent=47 // pred_region
        %v343 = vld [vmem:[%s321] sm:$0xff]
        %v344 = vld [vmem:[%s1] sm:$0x1]
        %v345 = vld [vmem:[%s2] sm:$0x1]
        %vm346 = vcmask 261120
        %v347 = vsel %vm346, %v343, 0.0
        %348 = vadd.xlane.f32.xlu0 %v347
        %v349 = vpop.xlane.xlu0 %348
        %v350 = vrcp.pop 32.0
        %v351 = vmul.f32 %v349, %v350
        %v352 = vsub.f32 %v343, %v351
        %v353 = vmul.f32 %v352, %v352
        %v354 = vsel %vm346, %v353, 0.0
        %355 = vadd.xlane.f32.xlu0 %v354
        %v356 = vpop.xlane.xlu0 %355
        %v357 = vmul.f32 %v356, %v350
        %v358 = vadd.f32 %v357, 1e-05
        %v359 = vrsqrt.pop %v358
        %v360 = vmul.f32 %v352, %v359
        %v362 = vlaneseq
        %v363 = vshrl.u32 %v362, 7
        %v364 = vsub.s32 0, %v363
        %v365 = vrot.slane %v344, %v364
        %v367 = vmul.f32 %v360, %v365
        %v369 = vlaneseq
        %v370 = vshrl.u32 %v369, 7
        %v371 = vsub.s32 0, %v370
        %v372 = vrot.slane %v345, %v371
        %v374 = vadd.f32 %v367, %v372
        %375 = vst.msk [vmem:[#allocation2] sm:$0xff] %vm346, %v374
        %376 = vst.msk [vmem:[#allocation3] sm:$0xff] %vm346, 0.0
      $region52: #{transformer_forward.11} parent=47 // pred_fallthru
        _
      %v377 = vld [vmem:[#allocation2] sm:$0xff]
      %v378 = vld [vmem:[%s325] sm:$0xff]
      %v379 = vld [vmem:[%s325 + $0x8] sm:$0xff]
      %v380 = vld [vmem:[%s325 + $0x10] sm:$0xff]
      %v381 = vld [vmem:[%s325 + $0x18] sm:$0xff]
      %v382 = vld [vmem:[%s328] sm:$0x1]
      %v384 = vlaneseq
      %v385 = vshrl.u32 %v384, 7
      %v386 = vsub.s32 0, %v385
      %v387 = vrot.slane %v382, %v386
      %vm389 = vcmask 261120
      %v391 = vsel %vm389, %v377, 0
      %393 = vmatprep.subr.mxu0 0.0
      %394 = vmatpush1.msra.mxu0 %v378
      %395 = vmatprep.subr.mxu0 0.0
      %396 = vmatpush1.msra.mxu0 %v379
      %397 = vmatprep.subr.mxu0 0.0
      %398 = vmatpush1.msra.mxu0 %v380
      %399 = vmatprep.subr.mxu0 0.0
      %400 = vmatpush1.msra.mxu0 %v381
      %401 = vmatprep.subr.mxu0 0.0
      %402 = vmatpush1.msra.mxu0 0.0
      %403 = vmatprep.subr.mxu0 0.0
      %404 = vmatpush1.msra.mxu0 0.0
      %405 = vmatprep.subr.mxu0 0.0
      %406 = vmatpush1.msra.mxu0 0.0
      %407 = vmatprep.subr.mxu0 0.0
      %408 = vmatpush1.msra.mxu0 0.0
      %409 = vmatprep.subr.mxu0 0.0
      %410 = vmatpush1.msra.mxu0 0.0
      %411 = vmatprep.subr.mxu0 0.0
      %412 = vmatpush1.msra.mxu0 0.0
      %413 = vmatprep.subr.mxu0 0.0
      %414 = vmatpush1.msra.mxu0 0.0
      %415 = vmatprep.subr.mxu0 0.0
      %416 = vmatpush1.msra.mxu0 0.0
      %417 = vmatprep.subr.mxu0 0.0
      %418 = vmatpush1.msra.mxu0 0.0
      %419 = vmatprep.subr.mxu0 0.0
      %420 = vmatpush1.msra.mxu0 0.0
      %421 = vmatprep.subr.mxu0 0.0
      %422 = vmatpush1.msra.mxu0 0.0
      %423 = vmatprep.subr.mxu0 0.0
      %424 = vmatpush1.msra.mxu0 0.0
      %425 = vmatprep.subr.mxu0 0.0
      %426 = vmatpush1.msra.mxu0 0.0
      %427 = vmatprep.subr.mxu0 0.0
      %428 = vmatpush1.msra.mxu0 0.0
      %429 = vmatprep.subr.mxu0 0.0
      %430 = vmatpush1.msra.mxu0 0.0
      %431 = vmatprep.subr.mxu0 0.0
      %432 = vmatpush1.msra.mxu0 0.0
      %433 = vmatprep.subr.mxu0 0.0
      %434 = vmatpush1.msra.mxu0 0.0
      %435 = vmatprep.subr.mxu0 0.0
      %436 = vmatpush1.msra.mxu0 0.0
      %437 = vmatprep.subr.mxu0 0.0
      %438 = vmatpush1.msra.mxu0 0.0
      %439 = vmatprep.subr.mxu0 0.0
      %440 = vmatpush1.msra.mxu0 0.0
      %441 = vmatprep.subr.mxu0 0.0
      %442 = vmatpush1.msra.mxu0 0.0
      %443 = vmatprep.subr.mxu0 0.0
      %444 = vmatpush1.msra.mxu0 0.0
      %445 = vmatprep.subr.mxu0 0.0
      %446 = vmatpush1.msra.mxu0 0.0
      %447 = vmatprep.subr.mxu0 0.0
      %448 = vmatpush1.msra.mxu0 0.0
      %449 = vmatprep.subr.mxu0 0.0
      %450 = vmatpush1.msra.mxu0 0.0
      %451 = vmatprep.subr.mxu0 0.0
      %452 = vmatpush1.msra.mxu0 0.0
      %453 = vmatprep.subr.mxu0 0.0
      %454 = vmatpush1.msra.mxu0 0.0
      %455 = vmatprep.subr.mxu0 0.0
      %456 = vmatpush1.msra.mxu0 0.0
      %457 = vmatprep.mubr.f32.mxu0 0.0
      %458 = vmatmul.mubr.f32.gmra.mrb[0].mxu0 %v391
      %v459 = vpop.f32.mrb[0].mxu0
      %v460 = vadd.f32 %v387, %v459
      %v461 = vpop.f32.mrb[0].mxu0
      %462 = vdwg.mxu0
      %v463 = vmul.f32 %v460, 0.5
      %v464 = vmul.f32 %v460, 0.044715
      %v465 = vmul.f32 %v464, %v460
      %v466 = vmul.f32 %v465, %v460
      %v467 = vadd.f32 %v460, %v466
      %v468 = vmul.f32 %v467, 0.7978846
      %v469 = vtanh.pop %v468
      %v470 = vadd.f32 %v469, 1.0
      %v471 = vmul.f32 %v463, %v470
      %v472 = vld [vmem:[#allocation3] sm:$0xff]
      %v473 = vld [vmem:[%s333] sm:$0xff]
      %v474 = vld [vmem:[%s333 + $0x8] sm:$0xff]
      %v475 = vld [vmem:[%s333 + $0x10] sm:$0xff]
      %v476 = vld [vmem:[%s333 + $0x18] sm:$0xff]
      %v477 = vld [vmem:[%s333 + $0x20] sm:$0xff]
      %v478 = vld [vmem:[%s333 + $0x28] sm:$0xff]
      %v479 = vld [vmem:[%s333 + $0x30] sm:$0xff]
      %v480 = vld [vmem:[%s333 + $0x38] sm:$0xff]
      %vm481 = vcmask 523264
      %v483 = vsel %vm481, %v471, 0
      %485 = vmatprep.subr.mxu0 0.0
      %486 = vmatpush1.msra.mxu0 %v473
      %487 = vmatprep.subr.mxu0 0.0
      %488 = vmatpush1.msra.mxu0 %v474
      %489 = vmatprep.subr.mxu0 0.0
      %490 = vmatpush1.msra.mxu0 %v475
      %491 = vmatprep.subr.mxu0 0.0
      %492 = vmatpush1.msra.mxu0 %v476
      %493 = vmatprep.subr.mxu0 0.0
      %494 = vmatpush1.msra.mxu0 %v477
      %495 = vmatprep.subr.mxu0 0.0
      %496 = vmatpush1.msra.mxu0 %v478
      %497 = vmatprep.subr.mxu0 0.0
      %498 = vmatpush1.msra.mxu0 %v479
      %499 = vmatprep.subr.mxu0 0.0
      %500 = vmatpush1.msra.mxu0 %v480
      %501 = vmatprep.subr.mxu0 0.0
      %502 = vmatpush1.msra.mxu0 0.0
      %503 = vmatprep.subr.mxu0 0.0
      %504 = vmatpush1.msra.mxu0 0.0
      %505 = vmatprep.subr.mxu0 0.0
      %506 = vmatpush1.msra.mxu0 0.0
      %507 = vmatprep.subr.mxu0 0.0
      %508 = vmatpush1.msra.mxu0 0.0
      %509 = vmatprep.subr.mxu0 0.0
      %510 = vmatpush1.msra.mxu0 0.0
      %511 = vmatprep.subr.mxu0 0.0
      %512 = vmatpush1.msra.mxu0 0.0
      %513 = vmatprep.subr.mxu0 0.0
      %514 = vmatpush1.msra.mxu0 0.0
      %515 = vmatprep.subr.mxu0 0.0
      %516 = vmatpush1.msra.mxu0 0.0
      %517 = vmatprep.subr.mxu0 0.0
      %518 = vmatpush1.msra.mxu0 0.0
      %519 = vmatprep.subr.mxu0 0.0
      %520 = vmatpush1.msra.mxu0 0.0
      %521 = vmatprep.subr.mxu0 0.0
      %522 = vmatpush1.msra.mxu0 0.0
      %523 = vmatprep.subr.mxu0 0.0
      %524 = vmatpush1.msra.mxu0 0.0
      %525 = vmatprep.subr.mxu0 0.0
      %526 = vmatpush1.msra.mxu0 0.0
      %527 = vmatprep.subr.mxu0 0.0
      %528 = vmatpush1.msra.mxu0 0.0
      %529 = vmatprep.subr.mxu0 0.0
      %530 = vmatpush1.msra.mxu0 0.0
      %531 = vmatprep.subr.mxu0 0.0
      %532 = vmatpush1.msra.mxu0 0.0
      %533 = vmatprep.subr.mxu0 0.0
      %534 = vmatpush1.msra.mxu0 0.0
      %535 = vmatprep.subr.mxu0 0.0
      %536 = vmatpush1.msra.mxu0 0.0
      %537 = vmatprep.subr.mxu0 0.0
      %538 = vmatpush1.msra.mxu0 0.0
      %539 = vmatprep.subr.mxu0 0.0
      %540 = vmatpush1.msra.mxu0 0.0
      %541 = vmatprep.subr.mxu0 0.0
      %542 = vmatpush1.msra.mxu0 0.0
      %543 = vmatprep.subr.mxu0 0.0
      %544 = vmatpush1.msra.mxu0 0.0
      %545 = vmatprep.subr.mxu0 0.0
      %546 = vmatpush1.msra.mxu0 0.0
      %547 = vmatprep.subr.mxu0 0.0
      %548 = vmatpush1.msra.mxu0 0.0
      %549 = vmatprep.mubr.f32.mxu0 0.0
      %550 = vmatmul.mubr.f32.gmra.mrb[0].mxu0 %v483
      %v551 = vpop.f32.mrb[0].mxu0
      %v552 = vadd.f32 0.0, %v551
      %v553 = vpop.f32.mrb[0].mxu0
      %554 = vdwg.mxu0
      %v555 = vadd.f32 %v472, %v552
      %556 = vst.msk [vmem:[#allocation3] sm:$0xff] %vm389, %v555
      // Predicated region
      $region53: #{transformer_forward.11} parent=47 // pred_check
        %p557 = pneg %p339
      $region54: #{transformer_forward.11} parent=47 // pred_check_branch
        %559 = sbr.rel (%p557) target = $region56
      $region55: #{transformer_forward.11} parent=47 // pred_region
        %v560 = vld [vmem:[#allocation3] sm:$0xff]
        %v561 = vld [vmem:[%s6] sm:$0x1]
        %v563 = vlaneseq
        %v564 = vshrl.u32 %v563, 7
        %v565 = vsub.s32 0, %v564
        %v566 = vrot.slane %v561, %v565
        %v568 = vadd.f32 %v560, %v566
        %v569 = vld [vmem:[%s321] sm:$0xff]
        %v570 = vadd.f32 %v568, %v569
        %571 = vst.msk [vmem:[%s338] sm:$0xff] %vm389, %v570
      $region56: #{transformer_forward.11} parent=47 // pred_fallthru
        _
      %p572 = scmp.lt.s32.totalorder %s22, 1
      %s573 = scalar_select %p572, %s22, 1
      %s574 = smul.addr %s573, 8
      %s575 = scalar_lea.vmem %s7, %s574
      // Predicated region
      $region57: #{transformer_forward.11} parent=47 // pred_check
        %p576 = pneg %p215
      $region58: #{transformer_forward.11} parent=47 // pred_check_branch
        %578 = sbr.rel (%p576) target = $region60
      $region59: #{transformer_forward.11} parent=47 // pred_region
        _
      $region60: #{transformer_forward.11} parent=47 // pred_fallthru
        _
    $region48: #{transformer_forward.11} parent=5 // pred_fallthru
      _
    %p579 = scmp.le.s32.totalorder 2, %s13
    // Predicated region
    $region61: #{transformer_forward.11} parent=5 // pred_check
      %p580 = pneg %p579
    $region62: #{transformer_forward.11} parent=5 // pred_check_branch
      %582 = sbr.rel (%p580) target = $region64
    $region63: #{transformer_forward.11} parent=5 // pred_region
      %s583 = ssub.s32 %s13, 2
      // Predicated region
      $region65: #{transformer_forward.11} parent=63 // pred_check
        %p584 = pneg %p221
      $region66: #{transformer_forward.11} parent=63 // pred_check_branch
        %586 = sbr.rel (%p584) target = $region68
      $region67: #{transformer_forward.11} parent=63 // pred_region
        %p587 = scmp.lt.s32.totalorder %s24, 1
        %s588 = scalar_select %p587, %s24, 1
        %s589 = smul.addr %s588, 8
        %s590 = scalar_lea.vmem %s7, %s589
      $region68: #{transformer_forward.11} parent=63 // pred_fallthru
        _
    $region64: #{transformer_forward.11} parent=5 // pred_fallthru
      _
  $region6: #{transformer_forward.11} parent=0 // loop_footer
    %s17 = sadd.s32 1, %s13
  $region7: #{transformer_forward.11} parent=0 // loop_footer_branch
    %12 = sbr.rel target = $region3
  $region8: #{transformer_forward.11} parent=0 // loop_exit
    _

</llo_original>
